<compile_context>
chip_gen: v7x
topology: tpu7x:2x2x1
jax: 0.10.0
libtpu: 0.0.40
codegen_flags: <defaults>
</compile_context>

<pallas_src>
import jax
import jax.numpy as jnp
from jax.experimental import pallas as pl
from jax.experimental.pallas import tpu as pltpu

_EPS = 1e-8


def _round_up(x, m):
    return (x + m - 1) // m * m


# ------------------------------- fused kernel --------------------------------
def _attention_kernel(hs_ref, ht_ref, mask_ref, waT_ref, w1_ref, w2_ref, b_ref,
                      htilde_ref, align_ref):
    ht = ht_ref[...]                                          # (B, hid)
    hs = hs_ref[...]                                          # (B, sl, d)

    # Fold Wa into h_t: <h_t, h_s @ Wa> == <h_t @ Wa^T, h_s>.
    ht_proj = jnp.dot(ht, waT_ref[...],
                      preferred_element_type=jnp.float32)     # (B, d)

    # scores[b, s] = <ht_proj[b], h_s[b, s]>  (batched MXU dot, q = 1)
    scores = jnp.einsum('bqd,bsd->bqs', ht_proj[:, None, :], hs,
                        preferred_element_type=jnp.float32)[:, 0, :]   # (B, sl)

    # Fused masked softmax + renormalization (identical to
    # softmax(scores)*mask / (sum(softmax*mask) + eps)).
    m = jnp.max(scores, axis=-1, keepdims=True)
    e = jnp.exp(scores - m)
    em = e * mask_ref[...]
    denom = (jnp.sum(em, axis=-1, keepdims=True)
             + _EPS * jnp.sum(e, axis=-1, keepdims=True))
    align = em / denom                                        # (B, sl)

    # context[b] = align[b] @ h_s[b]  (batched MXU dot; no (B,sl,d) product)
    context = jnp.einsum('bqs,bsd->bqd', align[:, None, :], hs,
                         preferred_element_type=jnp.float32)[:, 0, :]  # (B, d)

    # hidden Linear on concat([context, h_t]) without the concat:
    #   cat @ W + b == context @ W[:d] + h_t @ W[d:] + b
    # TODO(synk): dropout is identity here (eval-mode forward).
    pre = (jnp.dot(context, w1_ref[...], preferred_element_type=jnp.float32)
           + jnp.dot(ht, w2_ref[...], preferred_element_type=jnp.float32)
           + b_ref[...])
    htilde_ref[...] = jnp.tanh(pre)                           # (B, cell_dim)
    align_ref[...] = align                                    # (B, sl), lane-dense


# --------------------------------- wrapper ------------------------------------
def global_attention_forward(h_s, h_t, mask_src, Wa, W_hidden, b_hidden):
    """Equivalent to module.forward(module.precompute(h_s), h_t, mask_src, h_s)."""
    sl, bs, d = h_s.shape
    hid = Wa.shape[1]
    cell_dim = W_hidden.shape[1]

    # Batch-major, lane-dense layouts (sl on the lane axis of scores/align).
    hs_bm = jnp.transpose(h_s, (1, 0, 2)).astype(jnp.float32)    # (bs, sl, d)
    mask_bm = jnp.transpose(mask_src).astype(jnp.float32)        # (bs, sl)
    ht = h_t.astype(jnp.float32)
    waT = jnp.transpose(Wa).astype(jnp.float32)                  # (hid, d)
    w1 = W_hidden[:d, :].astype(jnp.float32)                     # (d,   cell_dim)
    w2 = W_hidden[d:, :].astype(jnp.float32)                     # (hid, cell_dim)
    b = b_hidden.reshape(1, cell_dim).astype(jnp.float32)

    # Tile over batch; pad bs up to a sublane-friendly multiple.
    bs_tile = min(128, _round_up(max(bs, 1), 8))
    bs_pad = _round_up(bs, bs_tile)
    if bs_pad != bs:
        pad = bs_pad - bs
        hs_bm = jnp.pad(hs_bm, ((0, pad), (0, 0), (0, 0)))
        ht = jnp.pad(ht, ((0, pad), (0, 0)))
        mask_bm = jnp.pad(mask_bm, ((0, pad), (0, 0)))   # zero mask -> align==0

    grid = (bs_pad // bs_tile,)
    # TODO(synk): for very long sources also stream sl in blocks (flash-style
    # online normalization) instead of holding the full (bs_tile, sl, d) window.

    h_tilde, alignment = pl.pallas_call(
        _attention_kernel,
        out_shape=(jax.ShapeDtypeStruct((bs_pad, cell_dim), jnp.float32),
                   jax.ShapeDtypeStruct((bs_pad, sl), jnp.float32)),
        grid=grid,
        in_specs=[
            pl.BlockSpec((bs_tile, sl, d), lambda i: (i, 0, 0)),   # h_s (batch-major)
            pl.BlockSpec((bs_tile, hid), lambda i: (i, 0)),        # h_t
            pl.BlockSpec((bs_tile, sl), lambda i: (i, 0)),         # mask (batch-major)
            pl.BlockSpec((hid, d), lambda i: (0, 0)),              # Wa^T
            pl.BlockSpec((d, cell_dim), lambda i: (0, 0)),         # W_hidden[:d]
            pl.BlockSpec((hid, cell_dim), lambda i: (0, 0)),       # W_hidden[d:]
            pl.BlockSpec((1, cell_dim), lambda i: (0, 0)),         # bias
        ],
        out_specs=(pl.BlockSpec((bs_tile, cell_dim), lambda i: (i, 0)),
                   pl.BlockSpec((bs_tile, sl), lambda i: (i, 0))),
        compiler_params=pltpu.CompilerParams(
            dimension_semantics=("parallel",),           # megacore split on v7x
            vmem_limit_bytes=32 * 1024 * 1024),
    )(hs_bm, ht, mask_bm, waT, w1, w2, b)

    return h_tilde[:bs], alignment[:bs]


# ----------------------------- pure-JAX reference -----------------------------
def _reference(h_s, h_t, mask_src, Wa, W_hidden, b_hidden):
    sl, bs, d = h_s.shape
    Wh_s = (h_s.reshape(sl * bs, d) @ Wa).reshape(sl, bs, -1)       # precompute()
    scores = jnp.sum(h_t[None, :, :] * Wh_s, axis=2)                # (sl, bs)
    align = jax.nn.softmax(scores, axis=0) * mask_src
    align = align / (jnp.sum(align, axis=0) + 1e-8)
    context = jnp.sum(align[:, :, None] * h_s, axis=0)              # (bs, d)
    cat = jnp.concatenate([context, h_t], axis=1)
    h_tilde = jnp.tanh(cat @ W_hidden + b_hidden)
    return h_tilde, align.T


if __name__ == "__main__":
    # module hyper-params
    cell_dim = 16
    hidden_size = cell_dim          # default hidden_size=None -> cell_dim
    d = 2 * cell_dim                # source hidden dim
    sl, bs = 8, 4                   # source length, batch

    key = jax.random.PRNGKey(0)
    k1, k2, k3, k4, k5, k6 = jax.random.split(key, 6)

    # parameters (shapes from __init__)
    Wa = jax.random.normal(k1, (d, hidden_size), jnp.float32) * 0.1
    W_hidden = jax.random.normal(k2, (d + hidden_size, cell_dim), jnp.float32) * 0.1
    b_hidden = jax.random.normal(k3, (cell_dim,), jnp.float32) * 0.1

    # inputs
    h_s = jax.random.normal(k4, (sl, bs, d), jnp.float32)
    h_t = jax.random.normal(k5, (bs, hidden_size), jnp.float32)
    mask_src = (jax.random.uniform(k6, (sl, bs)) > 0.2).astype(jnp.float32)

    h_tilde, alignment = global_attention_forward(
        h_s, h_t, mask_src, Wa, W_hidden, b_hidden)
    jax.block_until_ready((h_tilde, alignment))

    h_tilde_ref, align_ref = _reference(h_s, h_t, mask_src, Wa, W_hidden, b_hidden)
    assert h_tilde.shape == (bs, cell_dim)
    assert alignment.shape == (bs, sl)
    # Tolerance absorbs f32 reassociation from folding Wa into h_t / MXU dots.
    assert jnp.allclose(h_tilde, h_tilde_ref, atol=1e-4, rtol=1e-4)
    assert jnp.allclose(alignment, align_ref, atol=1e-4, rtol=1e-4)

    print("KERNEL_OK")
</pallas_src>

<mosaic_0001>
module attributes {stable_mosaic.version = 11 : i64} {
  func.func @_attention_kernel(%arg0: i32, %arg1: memref<8x8x32xf32, #tpu.memory_space<vmem>>, %arg2: memref<8x16xf32, #tpu.memory_space<vmem>>, %arg3: memref<8x8xf32, #tpu.memory_space<vmem>>, %arg4: memref<16x32xf32, #tpu.memory_space<vmem>>, %arg5: memref<32x16xf32, #tpu.memory_space<vmem>>, %arg6: memref<16x16xf32, #tpu.memory_space<vmem>>, %arg7: memref<1x16xf32, #tpu.memory_space<vmem>>, %arg8: memref<8x16xf32, #tpu.memory_space<vmem>>, %arg9: memref<8x8xf32, #tpu.memory_space<vmem>>) attributes {dimension_semantics = [#tpu.dimension_semantics<parallel>], iteration_bounds = array<i64: 1>, scalar_prefetch = 0 : i64, scratch_operands = 0 : i64, tpu.core_type = #tpu.core_type<tc>, window_params = [{transform_indices = @transform_0, window_bounds = array<i64: 8, 8, 32>}, {transform_indices = @transform_1, window_bounds = array<i64: 8, 16>}, {transform_indices = @transform_2, window_bounds = array<i64: 8, 8>}, {pipeline_mode = #tpu.pipeline_mode<synchronous>, transform_indices = @transform_3, window_bounds = array<i64: 16, 32>}, {pipeline_mode = #tpu.pipeline_mode<synchronous>, transform_indices = @transform_4, window_bounds = array<i64: 32, 16>}, {pipeline_mode = #tpu.pipeline_mode<synchronous>, transform_indices = @transform_5, window_bounds = array<i64: 16, 16>}, {pipeline_mode = #tpu.pipeline_mode<synchronous>, transform_indices = @transform_6, window_bounds = array<i64: 1, 16>}, {transform_indices = @transform_7, window_bounds = array<i64: 8, 16>}, {transform_indices = @transform_8, window_bounds = array<i64: 8, 8>}]} {
    %c0 = arith.constant 0 : index
    %c0_0 = arith.constant 0 : index
    %0 = vector.load %arg2[%c0, %c0_0] : memref<8x16xf32, #tpu.memory_space<vmem>>, vector<8x16xf32>
    %c0_1 = arith.constant 0 : index
    %c0_2 = arith.constant 0 : index
    %c0_3 = arith.constant 0 : index
    %1 = vector.load %arg1[%c0_1, %c0_2, %c0_3] : memref<8x8x32xf32, #tpu.memory_space<vmem>>, vector<8x8x32xf32>
    %c0_4 = arith.constant 0 : index
    %c0_5 = arith.constant 0 : index
    %2 = vector.load %arg4[%c0_4, %c0_5] : memref<16x32xf32, #tpu.memory_space<vmem>>, vector<16x32xf32>
    %cst = arith.constant dense<0.000000e+00> : vector<8x32xf32>
    %3 = tpu.matmul %0, %2, %cst {dimension_numbers = #tpu.dot_dimension_numbers<[1], [0], [0], [1], [0, 0, 1, 1], [], []>} : vector<8x16xf32>, vector<16x32xf32>, vector<8x32xf32> -> vector<8x32xf32>
    %4 = vector.shape_cast %3 : vector<8x32xf32> to vector<8x1x32xf32>
    "tpu.trace_start"() <{level = 10 : i32, message = "bqd,bsd->bqs"}> : () -> ()
    %cst_6 = arith.constant dense<0.000000e+00> : vector<8x1x8xf32>
    %5 = tpu.matmul %4, %1, %cst_6 {dimension_numbers = #tpu.dot_dimension_numbers<[2], [2], [1], [1], [0, 0, 0, 1, 1, 1], [0], [0]>} : vector<8x1x32xf32>, vector<8x8x32xf32>, vector<8x1x8xf32> -> vector<8x1x8xf32>
    "tpu.trace_stop"() : () -> ()
    %6 = vector.shape_cast %5 : vector<8x1x8xf32> to vector<8x8xf32>
    %cst_7 = arith.constant dense<0xFF800000> : vector<8xf32>
    %7 = vector.multi_reduction <maximumf>, %6, %cst_7 [1] : vector<8x8xf32> to vector<8xf32>
    %8 = vector.shape_cast %7 : vector<8xf32> to vector<8x1xf32>
    %9 = vector.broadcast %8 : vector<8x1xf32> to vector<8x8xf32>
    %10 = arith.subf %6, %9 : vector<8x8xf32>
    %11 = math.exp %10 : vector<8x8xf32>
    %c0_8 = arith.constant 0 : index
    %c0_9 = arith.constant 0 : index
    %12 = vector.load %arg3[%c0_8, %c0_9] : memref<8x8xf32, #tpu.memory_space<vmem>>, vector<8x8xf32>
    %13 = arith.mulf %11, %12 : vector<8x8xf32>
    %cst_10 = arith.constant dense<0.000000e+00> : vector<8xf32>
    %14 = vector.multi_reduction <add>, %13, %cst_10 [1] : vector<8x8xf32> to vector<8xf32>
    %15 = vector.shape_cast %14 : vector<8xf32> to vector<8x1xf32>
    %cst_11 = arith.constant dense<0.000000e+00> : vector<8xf32>
    %16 = vector.multi_reduction <add>, %11, %cst_11 [1] : vector<8x8xf32> to vector<8xf32>
    %17 = vector.shape_cast %16 : vector<8xf32> to vector<8x1xf32>
    %cst_12 = arith.constant 9.99999993E-9 : f32
    %18 = vector.broadcast %cst_12 : f32 to vector<8x1xf32>
    %19 = arith.mulf %18, %17 : vector<8x1xf32>
    %20 = arith.addf %15, %19 : vector<8x1xf32>
    %21 = vector.broadcast %20 : vector<8x1xf32> to vector<8x8xf32>
    %22 = arith.divf %13, %21 : vector<8x8xf32>
    %23 = vector.shape_cast %22 : vector<8x8xf32> to vector<8x1x8xf32>
    "tpu.trace_start"() <{level = 10 : i32, message = "bqs,bsd->bqd"}> : () -> ()
    %cst_13 = arith.constant dense<0.000000e+00> : vector<8x1x32xf32>
    %24 = tpu.matmul %23, %1, %cst_13 {dimension_numbers = #tpu.dot_dimension_numbers<[2], [1], [1], [2], [0, 0, 0, 1, 1, 2], [0], [0]>} : vector<8x1x8xf32>, vector<8x8x32xf32>, vector<8x1x32xf32> -> vector<8x1x32xf32>
    "tpu.trace_stop"() : () -> ()
    %25 = vector.shape_cast %24 : vector<8x1x32xf32> to vector<8x32xf32>
    %c0_14 = arith.constant 0 : index
    %c0_15 = arith.constant 0 : index
    %26 = vector.load %arg5[%c0_14, %c0_15] : memref<32x16xf32, #tpu.memory_space<vmem>>, vector<32x16xf32>
    %cst_16 = arith.constant dense<0.000000e+00> : vector<8x16xf32>
    %27 = tpu.matmul %25, %26, %cst_16 {dimension_numbers = #tpu.dot_dimension_numbers<[1], [0], [0], [1], [0, 0, 1, 1], [], []>} : vector<8x32xf32>, vector<32x16xf32>, vector<8x16xf32> -> vector<8x16xf32>
    %c0_17 = arith.constant 0 : index
    %c0_18 = arith.constant 0 : index
    %28 = vector.load %arg6[%c0_17, %c0_18] : memref<16x16xf32, #tpu.memory_space<vmem>>, vector<16x16xf32>
    %cst_19 = arith.constant dense<0.000000e+00> : vector<8x16xf32>
    %29 = tpu.matmul %0, %28, %cst_19 {dimension_numbers = #tpu.dot_dimension_numbers<[1], [0], [0], [1], [0, 0, 1, 1], [], []>} : vector<8x16xf32>, vector<16x16xf32>, vector<8x16xf32> -> vector<8x16xf32>
    %30 = arith.addf %27, %29 : vector<8x16xf32>
    %c0_20 = arith.constant 0 : index
    %c0_21 = arith.constant 0 : index
    %31 = vector.load %arg7[%c0_20, %c0_21] : memref<1x16xf32, #tpu.memory_space<vmem>>, vector<1x16xf32>
    %32 = vector.broadcast %31 : vector<1x16xf32> to vector<8x16xf32>
    %33 = arith.addf %30, %32 : vector<8x16xf32>
    %34 = math.tanh %33 : vector<8x16xf32>
    %c0_22 = arith.constant 0 : index
    %c0_23 = arith.constant 0 : index
    %35 = vector.load %arg8[%c0_22, %c0_23] : memref<8x16xf32, #tpu.memory_space<vmem>>, vector<8x16xf32>
    tpu.vector_store %arg8[%c0_22, %c0_23], %34 {strides = array<i32>} : memref<8x16xf32, #tpu.memory_space<vmem>>, vector<8x16xf32>,
    %c0_24 = arith.constant 0 : index
    %c0_25 = arith.constant 0 : index
    %36 = vector.load %arg9[%c0_24, %c0_25] : memref<8x8xf32, #tpu.memory_space<vmem>>, vector<8x8xf32>
    tpu.vector_store %arg9[%c0_24, %c0_25], %22 {strides = array<i32>} : memref<8x8xf32, #tpu.memory_space<vmem>>, vector<8x8xf32>,
    return
  }
  func.func @transform_0(%arg0: i32) -> (i32, i32, i32) {
    %c0_i32 = arith.constant 0 : i32
    %c0_i32_0 = arith.constant 0 : i32
    %c0_i32_1 = arith.constant 0 : i32
    return %arg0, %c0_i32, %c0_i32_0 : i32, i32, i32
  }
  func.func @transform_1(%arg0: i32) -> (i32, i32) {
    %c0_i32 = arith.constant 0 : i32
    %c0_i32_0 = arith.constant 0 : i32
    return %arg0, %c0_i32 : i32, i32
  }
  func.func @transform_2(%arg0: i32) -> (i32, i32) {
    %c0_i32 = arith.constant 0 : i32
    %c0_i32_0 = arith.constant 0 : i32
    return %arg0, %c0_i32 : i32, i32
  }
  func.func @transform_3(%arg0: i32) -> (i32, i32) {
    %c0_i32 = arith.constant 0 : i32
    %c0_i32_0 = arith.constant 0 : i32
    %c0_i32_1 = arith.constant 0 : i32
    return %c0_i32, %c0_i32_0 : i32, i32
  }
  func.func @transform_4(%arg0: i32) -> (i32, i32) {
    %c0_i32 = arith.constant 0 : i32
    %c0_i32_0 = arith.constant 0 : i32
    %c0_i32_1 = arith.constant 0 : i32
    return %c0_i32, %c0_i32_0 : i32, i32
  }
  func.func @transform_5(%arg0: i32) -> (i32, i32) {
    %c0_i32 = arith.constant 0 : i32
    %c0_i32_0 = arith.constant 0 : i32
    %c0_i32_1 = arith.constant 0 : i32
    return %c0_i32, %c0_i32_0 : i32, i32
  }
  func.func @transform_6(%arg0: i32) -> (i32, i32) {
    %c0_i32 = arith.constant 0 : i32
    %c0_i32_0 = arith.constant 0 : i32
    %c0_i32_1 = arith.constant 0 : i32
    return %c0_i32, %c0_i32_0 : i32, i32
  }
  func.func @transform_7(%arg0: i32) -> (i32, i32) {
    %c0_i32 = arith.constant 0 : i32
    %c0_i32_0 = arith.constant 0 : i32
    return %arg0, %c0_i32 : i32, i32
  }
  func.func @transform_8(%arg0: i32) -> (i32, i32) {
    %c0_i32 = arith.constant 0 : i32
    %c0_i32_0 = arith.constant 0 : i32
    return %arg0, %c0_i32 : i32, i32
  }
}

</mosaic_0001>

<llo_original>
// kernel: tpu_custom_call.1
$region0: #{tpu_custom_call.1}
  #allocation0 [shape = 'u32[]', space=smem, size = 0x4, offset = 0x4, fixed_abs, tag = 'smem constant byte address 0x4 - core index']
  #allocation1 [shape = 'u32[144,128]{1,0:T(1,128)}', space=vmem, size = 0x12000, scoped, tag = 'internal scratch']
  %s0 = inlined_call_operand.hbm [shape: f32[8,8,32], index: 0, kind: input, shape index: {}]
  %s1 = inlined_call_operand.vmem [shape: f32[8,16], index: 1, kind: input, shape index: {}]
  %s2 = inlined_call_operand.vmem [shape: f32[8,8], index: 2, kind: input, shape index: {}]
  %s3 = inlined_call_operand.vmem [shape: f32[16,32], index: 3, kind: input, shape index: {}]
  %s4 = inlined_call_operand.vmem [shape: f32[32,16], index: 4, kind: input, shape index: {}]
  %s5 = inlined_call_operand.vmem [shape: f32[16,16], index: 5, kind: input, shape index: {}]
  %s6 = inlined_call_operand.vmem [shape: f32[1,16], index: 6, kind: input, shape index: {}]
  %s7 = inlined_call_operand.hbm [shape: f32[8,16], index: 7, kind: output, shape index: {0}]
  %s8 = inlined_call_operand.hbm [shape: f32[8,8], index: 8, kind: output, shape index: {1}]
  %9 = xla_tuple %s7, %s8
  %s10 = sld [smem:[#allocation0]]
  $region50: #{tpu_custom_call.1} parent=0
    _
  %s12 = ssub.s32 1, %s10
  %s13 = scalar_select 0, %s12, %s10
  $region1: #{tpu_custom_call.1} parent=0
    #allocation2 [shape = 'u8[32768]{0}', space=vmem, size = 0x8000, scoped, tag = 'input window, operand 0, single buffered']
    #allocation3 [shape = 's32[1]{0}', space=sflag, size = 0x4, scoped, tag = 'scoped memory for tpu_custom_call.1']
    #allocation4 [shape = 's32[1]{0}', space=sflag, size = 0x4, scoped, tag = 'scoped memory for tpu_custom_call.1']
    #allocation5 [shape = 'u8[4096]{0}', space=vmem, size = 0x1000, scoped, tag = 'output window, operand 0, single buffered']
    #allocation6 [shape = 'u8[4096]{0}', space=vmem, size = 0x1000, scoped, tag = 'output window, operand 1, single buffered']
    #allocation7 [shape = 's32[1]{0}', space=sflag, size = 0x4, scoped, tag = 'scoped memory for tpu_custom_call.1']
    %14 = vsyncpa [#allocation3], 0
    %15 = vsyncpa [#allocation4], 0
    %16 = vsyncpa [#allocation7], 0
    // Predicated region
    $region2: #{tpu_custom_call.1} parent=1 // pred_check
      _
    $region3: #{tpu_custom_call.1} parent=1 // pred_check_branch
      %18 = sbr.rel (0) target = $region5
    $region4: #{tpu_custom_call.1} parent=1 // pred_region
      %s20 = ssub.s32 1024, 1024
      %21 = vsyncadd [#allocation3], %s20
      %s22 = sshll.u32 [#allocation2], 4
      %s23 = int_to_ptr.vmem [resolvable:$true] %s22
      %28 = dma.hbm_to_vmem [thread:$0]  %s0, 1024, %s23, [#allocation3], 128, 128, 8
    $region5: #{tpu_custom_call.1} parent=1 // pred_fallthru
      _
    // Predicated region
    $region6: #{tpu_custom_call.1} parent=1 // pred_check
      _
    $region7: #{tpu_custom_call.1} parent=1 // pred_check_branch
      %30 = sbr.rel (0) target = $region9
    $region8: #{tpu_custom_call.1} parent=1 // pred_region
      _
    $region9: #{tpu_custom_call.1} parent=1 // pred_fallthru
      _
    // Predicated region
    $region10: #{tpu_custom_call.1} parent=1 // pred_check
      _
    $region11: #{tpu_custom_call.1} parent=1 // pred_check_branch
      %32 = sbr.rel (0) target = $region13
    $region12: #{tpu_custom_call.1} parent=1 // pred_region
      _
    $region13: #{tpu_custom_call.1} parent=1 // pred_fallthru
      _
    // Predicated region
    $region14: #{tpu_custom_call.1} parent=1 // pred_check
      _
    $region15: #{tpu_custom_call.1} parent=1 // pred_check_branch
      %34 = sbr.rel (0) target = $region17
    $region16: #{tpu_custom_call.1} parent=1 // pred_region
      _
    $region17: #{tpu_custom_call.1} parent=1 // pred_fallthru
      _
    // Predicated region
    $region18: #{tpu_custom_call.1} parent=1 // pred_check
      _
    $region19: #{tpu_custom_call.1} parent=1 // pred_check_branch
      %36 = sbr.rel (0) target = $region21
    $region20: #{tpu_custom_call.1} parent=1 // pred_region
      _
    $region21: #{tpu_custom_call.1} parent=1 // pred_fallthru
      _
    // Predicated region
    $region22: #{tpu_custom_call.1} parent=1 // pred_check
      _
    $region23: #{tpu_custom_call.1} parent=1 // pred_check_branch
      %38 = sbr.rel (0) target = $region25
    $region24: #{tpu_custom_call.1} parent=1 // pred_region
      _
    $region25: #{tpu_custom_call.1} parent=1 // pred_fallthru
      _
    // Predicated region
    $region26: #{tpu_custom_call.1} parent=1 // pred_check
      _
    $region27: #{tpu_custom_call.1} parent=1 // pred_check_branch
      %40 = sbr.rel (0) target = $region29
    $region28: #{tpu_custom_call.1} parent=1 // pred_region
      _
    $region29: #{tpu_custom_call.1} parent=1 // pred_fallthru
      _
    // Predicated region
    $region30: #{tpu_custom_call.1} parent=1 // pred_check
      _
    $region31: #{tpu_custom_call.1} parent=1 // pred_check_branch
      %42 = sbr.rel (0) target = $region33
    $region32: #{tpu_custom_call.1} parent=1 // pred_region
      %43 = dma.done [#allocation3], 1024
    $region33: #{tpu_custom_call.1} parent=1 // pred_fallthru
      _
    %v44 = vld [vmem:[%s1] sm:$0xff]
    %v45 = vld [vmem:[#allocation2] sm:$0xff]
    %v46 = vld [vmem:[#allocation2 + $0x8] sm:$0xff]
    %v47 = vld [vmem:[#allocation2 + $0x10] sm:$0xff]
    %v48 = vld [vmem:[#allocation2 + $0x18] sm:$0xff]
    %v49 = vld [vmem:[#allocation2 + $0x20] sm:$0xff]
    %v50 = vld [vmem:[#allocation2 + $0x28] sm:$0xff]
    %v51 = vld [vmem:[#allocation2 + $0x30] sm:$0xff]
    %v52 = vld [vmem:[#allocation2 + $0x38] sm:$0xff]
    %v53 = vld [vmem:[%s3] sm:$0xff]
    %v54 = vld [vmem:[%s3 + $0x8] sm:$0xff]
    %vm55 = vcmask 130048
    %v57 = vsel %vm55, %v44, 0
    %59 = vmatprep.subr.mxu0 0.0
    %60 = vmatpush1.msra.mxu0 %v53
    %61 = vmatprep.subr.mxu0 0.0
    %62 = vmatpush1.msra.mxu0 %v54
    %63 = vmatprep.subr.mxu0 0.0
    %64 = vmatpush1.msra.mxu0 0.0
    %65 = vmatprep.subr.mxu0 0.0
    %66 = vmatpush1.msra.mxu0 0.0
    %67 = vmatprep.subr.mxu0 0.0
    %68 = vmatpush1.msra.mxu0 0.0
    %69 = vmatprep.subr.mxu0 0.0
    %70 = vmatpush1.msra.mxu0 0.0
    %71 = vmatprep.subr.mxu0 0.0
    %72 = vmatpush1.msra.mxu0 0.0
    %73 = vmatprep.subr.mxu0 0.0
    %74 = vmatpush1.msra.mxu0 0.0
    %75 = vmatprep.subr.mxu0 0.0
    %76 = vmatpush1.msra.mxu0 0.0
    %77 = vmatprep.subr.mxu0 0.0
    %78 = vmatpush1.msra.mxu0 0.0
    %79 = vmatprep.subr.mxu0 0.0
    %80 = vmatpush1.msra.mxu0 0.0
    %81 = vmatprep.subr.mxu0 0.0
    %82 = vmatpush1.msra.mxu0 0.0
    %83 = vmatprep.subr.mxu0 0.0
    %84 = vmatpush1.msra.mxu0 0.0
    %85 = vmatprep.subr.mxu0 0.0
    %86 = vmatpush1.msra.mxu0 0.0
    %87 = vmatprep.subr.mxu0 0.0
    %88 = vmatpush1.msra.mxu0 0.0
    %89 = vmatprep.subr.mxu0 0.0
    %90 = vmatpush1.msra.mxu0 0.0
    %91 = vmatprep.subr.mxu0 0.0
    %92 = vmatpush1.msra.mxu0 0.0
    %93 = vmatprep.subr.mxu0 0.0
    %94 = vmatpush1.msra.mxu0 0.0
    %95 = vmatprep.subr.mxu0 0.0
    %96 = vmatpush1.msra.mxu0 0.0
    %97 = vmatprep.subr.mxu0 0.0
    %98 = vmatpush1.msra.mxu0 0.0
    %99 = vmatprep.subr.mxu0 0.0
    %100 = vmatpush1.msra.mxu0 0.0
    %101 = vmatprep.subr.mxu0 0.0
    %102 = vmatpush1.msra.mxu0 0.0
    %103 = vmatprep.subr.mxu0 0.0
    %104 = vmatpush1.msra.mxu0 0.0
    %105 = vmatprep.subr.mxu0 0.0
    %106 = vmatpush1.msra.mxu0 0.0
    %107 = vmatprep.subr.mxu0 0.0
    %108 = vmatpush1.msra.mxu0 0.0
    %109 = vmatprep.subr.mxu0 0.0
    %110 = vmatpush1.msra.mxu0 0.0
    %111 = vmatprep.subr.mxu0 0.0
    %112 = vmatpush1.msra.mxu0 0.0
    %113 = vmatprep.subr.mxu0 0.0
    %114 = vmatpush1.msra.mxu0 0.0
    %115 = vmatprep.subr.mxu0 0.0
    %116 = vmatpush1.msra.mxu0 0.0
    %117 = vmatprep.subr.mxu0 0.0
    %118 = vmatpush1.msra.mxu0 0.0
    %119 = vmatprep.subr.mxu0 0.0
    %120 = vmatpush1.msra.mxu0 0.0
    %121 = vmatprep.subr.mxu0 0.0
    %122 = vmatpush1.msra.mxu0 0.0
    %123 = vmatprep.mubr.f32.mxu0 0.0
    %124 = vmatmul.mubr.f32.gmra.mrb[0].mxu0 %v57
    %v125 = vpop.f32.mrb[0].mxu0
    %v126 = vadd.f32 0.0, %v125
    %v127 = vpop.f32.mrb[0].mxu0
    %128 = vdwg.mxu0
    %v130 = vcombine.high %v126, %v126
    %v132 = vunpack.c.l.s4 1966171168
    %v133 = vunpack.c.0.s8 %v132
    %v134 = vlaneseq
    %v135 = vshrl.u32 %v134, 7
    %v136 = vsub.s32 %v133, %v135
    %v137 = vrot.slane %v126, %v136
    %v139 = vunpack.c.l.s4 1966171168
    %v140 = vunpack.c.0.s8 %v139
    %v141 = vlaneseq
    %v142 = vshrl.u32 %v141, 7
    %v143 = vsub.s32 %v140, %v142
    %v144 = vrot.slane %v130, %v143
    %v145 = vcombine.high %v137, %v137
    %v146 = vcombine.high %v144, %v144
    %v148 = vunpack.c.l.s4 1966171168
    %v149 = vunpack.c.0.s8 %v148
    %v150 = vlaneseq
    %v151 = vshrl.u32 %v150, 7
    %v152 = vsub.s32 %v149, %v151
    %v153 = vrot.slane %v137, %v152
    %v155 = vunpack.c.l.s4 1966171168
    %v156 = vunpack.c.0.s8 %v155
    %v157 = vlaneseq
    %v158 = vshrl.u32 %v157, 7
    %v159 = vsub.s32 %v156, %v158
    %v160 = vrot.slane %v144, %v159
    %v162 = vunpack.c.l.s4 1966171168
    %v163 = vunpack.c.0.s8 %v162
    %v164 = vlaneseq
    %v165 = vshrl.u32 %v164, 7
    %v166 = vsub.s32 %v163, %v165
    %v167 = vrot.slane %v145, %v166
    %v169 = vunpack.c.l.s4 1966171168
    %v170 = vunpack.c.0.s8 %v169
    %v171 = vlaneseq
    %v172 = vshrl.u32 %v171, 7
    %v173 = vsub.s32 %v170, %v172
    %v174 = vrot.slane %v146, %v173
    %v175 = vcombine.high %v153, %v153
    %v176 = vcombine.high %v160, %v160
    %v177 = vcombine.high %v167, %v167
    %v178 = vcombine.high %v174, %v174
    %vm179 = vcmask 261120
    %v180 = vsel %vm179, %v153, 0
    %v183 = vsel %vm179, %v45, 0
    %185 = vmatprep.subr.mxu0 0.0
    %186 = vmatpush1.xpose.msra.mxu0 %v183
    %187 = vmatprep.subr.mxu0 0.0
    %188 = vmatpush1.xpose.msra.mxu0 0.0
    %189 = vmatprep.subr.mxu0 0.0
    %190 = vmatpush1.xpose.msra.mxu0 0.0
    %191 = vmatprep.subr.mxu0 0.0
    %192 = vmatpush1.xpose.msra.mxu0 0.0
    %193 = vmatprep.subr.mxu0 0.0
    %194 = vmatpush1.xpose.msra.mxu0 0.0
    %195 = vmatprep.subr.mxu0 0.0
    %196 = vmatpush1.xpose.msra.mxu0 0.0
    %197 = vmatprep.subr.mxu0 0.0
    %198 = vmatpush1.xpose.msra.mxu0 0.0
    %199 = vmatprep.subr.mxu0 0.0
    %200 = vmatpush1.xpose.msra.mxu0 0.0
    %201 = vmatprep.subr.mxu0 0.0
    %202 = vmatpush1.xpose.msra.mxu0 0.0
    %203 = vmatprep.subr.mxu0 0.0
    %204 = vmatpush1.xpose.msra.mxu0 0.0
    %205 = vmatprep.subr.mxu0 0.0
    %206 = vmatpush1.xpose.msra.mxu0 0.0
    %207 = vmatprep.subr.mxu0 0.0
    %208 = vmatpush1.xpose.msra.mxu0 0.0
    %209 = vmatprep.subr.mxu0 0.0
    %210 = vmatpush1.xpose.msra.mxu0 0.0
    %211 = vmatprep.subr.mxu0 0.0
    %212 = vmatpush1.xpose.msra.mxu0 0.0
    %213 = vmatprep.subr.mxu0 0.0
    %214 = vmatpush1.xpose.msra.mxu0 0.0
    %215 = vmatprep.subr.mxu0 0.0
    %216 = vmatpush1.xpose.msra.mxu0 0.0
    %217 = vmatprep.subr.mxu0 0.0
    %218 = vmatpush1.xpose.msra.mxu0 0.0
    %219 = vmatprep.subr.mxu0 0.0
    %220 = vmatpush1.xpose.msra.mxu0 0.0
    %221 = vmatprep.subr.mxu0 0.0
    %222 = vmatpush1.xpose.msra.mxu0 0.0
    %223 = vmatprep.subr.mxu0 0.0
    %224 = vmatpush1.xpose.msra.mxu0 0.0
    %225 = vmatprep.subr.mxu0 0.0
    %226 = vmatpush1.xpose.msra.mxu0 0.0
    %227 = vmatprep.subr.mxu0 0.0
    %228 = vmatpush1.xpose.msra.mxu0 0.0
    %229 = vmatprep.subr.mxu0 0.0
    %230 = vmatpush1.xpose.msra.mxu0 0.0
    %231 = vmatprep.subr.mxu0 0.0
    %232 = vmatpush1.xpose.msra.mxu0 0.0
    %233 = vmatprep.subr.mxu0 0.0
    %234 = vmatpush1.xpose.msra.mxu0 0.0
    %235 = vmatprep.subr.mxu0 0.0
    %236 = vmatpush1.xpose.msra.mxu0 0.0
    %237 = vmatprep.subr.mxu0 0.0
    %238 = vmatpush1.xpose.msra.mxu0 0.0
    %239 = vmatprep.subr.mxu0 0.0
    %240 = vmatpush1.xpose.msra.mxu0 0.0
    %241 = vmatprep.subr.mxu0 0.0
    %242 = vmatpush1.xpose.msra.mxu0 0.0
    %243 = vmatprep.subr.mxu0 0.0
    %244 = vmatpush1.xpose.msra.mxu0 0.0
    %245 = vmatprep.subr.mxu0 0.0
    %246 = vmatpush1.xpose.msra.mxu0 0.0
    %247 = vmatprep.subr.mxu0 0.0
    %248 = vmatpush1.xpose.msra.mxu0 0.0
    %249 = vmatprep.mubr.f32.mxu0 0.0
    %250 = vmatmul.mubr.f32.gmra.mrb[0].mxu0 %v180
    %v251 = vpop.f32.mrb[0].mxu0
    %v252 = vadd.f32 0.0, %v251
    %v253 = vpop.f32.mrb[0].mxu0
    %254 = vdwg.mxu0
    %v255 = vsel %vm179, %v167, 0
    %v258 = vsel %vm179, %v46, 0
    %260 = vmatprep.subr.mxu0 0.0
    %261 = vmatpush1.xpose.msra.mxu0 %v258
    %262 = vmatprep.subr.mxu0 0.0
    %263 = vmatpush1.xpose.msra.mxu0 0.0
    %264 = vmatprep.subr.mxu0 0.0
    %265 = vmatpush1.xpose.msra.mxu0 0.0
    %266 = vmatprep.subr.mxu0 0.0
    %267 = vmatpush1.xpose.msra.mxu0 0.0
    %268 = vmatprep.subr.mxu0 0.0
    %269 = vmatpush1.xpose.msra.mxu0 0.0
    %270 = vmatprep.subr.mxu0 0.0
    %271 = vmatpush1.xpose.msra.mxu0 0.0
    %272 = vmatprep.subr.mxu0 0.0
    %273 = vmatpush1.xpose.msra.mxu0 0.0
    %274 = vmatprep.subr.mxu0 0.0
    %275 = vmatpush1.xpose.msra.mxu0 0.0
    %276 = vmatprep.subr.mxu0 0.0
    %277 = vmatpush1.xpose.msra.mxu0 0.0
    %278 = vmatprep.subr.mxu0 0.0
    %279 = vmatpush1.xpose.msra.mxu0 0.0
    %280 = vmatprep.subr.mxu0 0.0
    %281 = vmatpush1.xpose.msra.mxu0 0.0
    %282 = vmatprep.subr.mxu0 0.0
    %283 = vmatpush1.xpose.msra.mxu0 0.0
    %284 = vmatprep.subr.mxu0 0.0
    %285 = vmatpush1.xpose.msra.mxu0 0.0
    %286 = vmatprep.subr.mxu0 0.0
    %287 = vmatpush1.xpose.msra.mxu0 0.0
    %288 = vmatprep.subr.mxu0 0.0
    %289 = vmatpush1.xpose.msra.mxu0 0.0
    %290 = vmatprep.subr.mxu0 0.0
    %291 = vmatpush1.xpose.msra.mxu0 0.0
    %292 = vmatprep.subr.mxu0 0.0
    %293 = vmatpush1.xpose.msra.mxu0 0.0
    %294 = vmatprep.subr.mxu0 0.0
    %295 = vmatpush1.xpose.msra.mxu0 0.0
    %296 = vmatprep.subr.mxu0 0.0
    %297 = vmatpush1.xpose.msra.mxu0 0.0
    %298 = vmatprep.subr.mxu0 0.0
    %299 = vmatpush1.xpose.msra.mxu0 0.0
    %300 = vmatprep.subr.mxu0 0.0
    %301 = vmatpush1.xpose.msra.mxu0 0.0
    %302 = vmatprep.subr.mxu0 0.0
    %303 = vmatpush1.xpose.msra.mxu0 0.0
    %304 = vmatprep.subr.mxu0 0.0
    %305 = vmatpush1.xpose.msra.mxu0 0.0
    %306 = vmatprep.subr.mxu0 0.0
    %307 = vmatpush1.xpose.msra.mxu0 0.0
    %308 = vmatprep.subr.mxu0 0.0
    %309 = vmatpush1.xpose.msra.mxu0 0.0
    %310 = vmatprep.subr.mxu0 0.0
    %311 = vmatpush1.xpose.msra.mxu0 0.0
    %312 = vmatprep.subr.mxu0 0.0
    %313 = vmatpush1.xpose.msra.mxu0 0.0
    %314 = vmatprep.subr.mxu0 0.0
    %315 = vmatpush1.xpose.msra.mxu0 0.0
    %316 = vmatprep.subr.mxu0 0.0
    %317 = vmatpush1.xpose.msra.mxu0 0.0
    %318 = vmatprep.subr.mxu0 0.0
    %319 = vmatpush1.xpose.msra.mxu0 0.0
    %320 = vmatprep.subr.mxu0 0.0
    %321 = vmatpush1.xpose.msra.mxu0 0.0
    %322 = vmatprep.subr.mxu0 0.0
    %323 = vmatpush1.xpose.msra.mxu0 0.0
    %324 = vmatprep.mubr.f32.mxu0 0.0
    %325 = vmatmul.mubr.f32.gmra.mrb[0].mxu0 %v255
    %v326 = vpop.f32.mrb[0].mxu0
    %v327 = vadd.f32 0.0, %v326
    %v328 = vpop.f32.mrb[0].mxu0
    %329 = vdwg.mxu0
    %v330 = vsel %vm179, %v175, 0
    %v333 = vsel %vm179, %v47, 0
    %335 = vmatprep.subr.mxu0 0.0
    %336 = vmatpush1.xpose.msra.mxu0 %v333
    %337 = vmatprep.subr.mxu0 0.0
    %338 = vmatpush1.xpose.msra.mxu0 0.0
    %339 = vmatprep.subr.mxu0 0.0
    %340 = vmatpush1.xpose.msra.mxu0 0.0
    %341 = vmatprep.subr.mxu0 0.0
    %342 = vmatpush1.xpose.msra.mxu0 0.0
    %343 = vmatprep.subr.mxu0 0.0
    %344 = vmatpush1.xpose.msra.mxu0 0.0
    %345 = vmatprep.subr.mxu0 0.0
    %346 = vmatpush1.xpose.msra.mxu0 0.0
    %347 = vmatprep.subr.mxu0 0.0
    %348 = vmatpush1.xpose.msra.mxu0 0.0
    %349 = vmatprep.subr.mxu0 0.0
    %350 = vmatpush1.xpose.msra.mxu0 0.0
    %351 = vmatprep.subr.mxu0 0.0
    %352 = vmatpush1.xpose.msra.mxu0 0.0
    %353 = vmatprep.subr.mxu0 0.0
    %354 = vmatpush1.xpose.msra.mxu0 0.0
    %355 = vmatprep.subr.mxu0 0.0
    %356 = vmatpush1.xpose.msra.mxu0 0.0
    %357 = vmatprep.subr.mxu0 0.0
    %358 = vmatpush1.xpose.msra.mxu0 0.0
    %359 = vmatprep.subr.mxu0 0.0
    %360 = vmatpush1.xpose.msra.mxu0 0.0
    %361 = vmatprep.subr.mxu0 0.0
    %362 = vmatpush1.xpose.msra.mxu0 0.0
    %363 = vmatprep.subr.mxu0 0.0
    %364 = vmatpush1.xpose.msra.mxu0 0.0
    %365 = vmatprep.subr.mxu0 0.0
    %366 = vmatpush1.xpose.msra.mxu0 0.0
    %367 = vmatprep.subr.mxu0 0.0
    %368 = vmatpush1.xpose.msra.mxu0 0.0
    %369 = vmatprep.subr.mxu0 0.0
    %370 = vmatpush1.xpose.msra.mxu0 0.0
    %371 = vmatprep.subr.mxu0 0.0
    %372 = vmatpush1.xpose.msra.mxu0 0.0
    %373 = vmatprep.subr.mxu0 0.0
    %374 = vmatpush1.xpose.msra.mxu0 0.0
    %375 = vmatprep.subr.mxu0 0.0
    %376 = vmatpush1.xpose.msra.mxu0 0.0
    %377 = vmatprep.subr.mxu0 0.0
    %378 = vmatpush1.xpose.msra.mxu0 0.0
    %379 = vmatprep.subr.mxu0 0.0
    %380 = vmatpush1.xpose.msra.mxu0 0.0
    %381 = vmatprep.subr.mxu0 0.0
    %382 = vmatpush1.xpose.msra.mxu0 0.0
    %383 = vmatprep.subr.mxu0 0.0
    %384 = vmatpush1.xpose.msra.mxu0 0.0
    %385 = vmatprep.subr.mxu0 0.0
    %386 = vmatpush1.xpose.msra.mxu0 0.0
    %387 = vmatprep.subr.mxu0 0.0
    %388 = vmatpush1.xpose.msra.mxu0 0.0
    %389 = vmatprep.subr.mxu0 0.0
    %390 = vmatpush1.xpose.msra.mxu0 0.0
    %391 = vmatprep.subr.mxu0 0.0
    %392 = vmatpush1.xpose.msra.mxu0 0.0
    %393 = vmatprep.subr.mxu0 0.0
    %394 = vmatpush1.xpose.msra.mxu0 0.0
    %395 = vmatprep.subr.mxu0 0.0
    %396 = vmatpush1.xpose.msra.mxu0 0.0
    %397 = vmatprep.subr.mxu0 0.0
    %398 = vmatpush1.xpose.msra.mxu0 0.0
    %399 = vmatprep.mubr.f32.mxu0 0.0
    %400 = vmatmul.mubr.f32.gmra.mrb[0].mxu0 %v330
    %v401 = vpop.f32.mrb[0].mxu0
    %v402 = vadd.f32 0.0, %v401
    %v403 = vpop.f32.mrb[0].mxu0
    %404 = vdwg.mxu0
    %v405 = vsel %vm179, %v177, 0
    %v408 = vsel %vm179, %v48, 0
    %410 = vmatprep.subr.mxu0 0.0
    %411 = vmatpush1.xpose.msra.mxu0 %v408
    %412 = vmatprep.subr.mxu0 0.0
    %413 = vmatpush1.xpose.msra.mxu0 0.0
    %414 = vmatprep.subr.mxu0 0.0
    %415 = vmatpush1.xpose.msra.mxu0 0.0
    %416 = vmatprep.subr.mxu0 0.0
    %417 = vmatpush1.xpose.msra.mxu0 0.0
    %418 = vmatprep.subr.mxu0 0.0
    %419 = vmatpush1.xpose.msra.mxu0 0.0
    %420 = vmatprep.subr.mxu0 0.0
    %421 = vmatpush1.xpose.msra.mxu0 0.0
    %422 = vmatprep.subr.mxu0 0.0
    %423 = vmatpush1.xpose.msra.mxu0 0.0
    %424 = vmatprep.subr.mxu0 0.0
    %425 = vmatpush1.xpose.msra.mxu0 0.0
    %426 = vmatprep.subr.mxu0 0.0
    %427 = vmatpush1.xpose.msra.mxu0 0.0
    %428 = vmatprep.subr.mxu0 0.0
    %429 = vmatpush1.xpose.msra.mxu0 0.0
    %430 = vmatprep.subr.mxu0 0.0
    %431 = vmatpush1.xpose.msra.mxu0 0.0
    %432 = vmatprep.subr.mxu0 0.0
    %433 = vmatpush1.xpose.msra.mxu0 0.0
    %434 = vmatprep.subr.mxu0 0.0
    %435 = vmatpush1.xpose.msra.mxu0 0.0
    %436 = vmatprep.subr.mxu0 0.0
    %437 = vmatpush1.xpose.msra.mxu0 0.0
    %438 = vmatprep.subr.mxu0 0.0
    %439 = vmatpush1.xpose.msra.mxu0 0.0
    %440 = vmatprep.subr.mxu0 0.0
    %441 = vmatpush1.xpose.msra.mxu0 0.0
    %442 = vmatprep.subr.mxu0 0.0
    %443 = vmatpush1.xpose.msra.mxu0 0.0
    %444 = vmatprep.subr.mxu0 0.0
    %445 = vmatpush1.xpose.msra.mxu0 0.0
    %446 = vmatprep.subr.mxu0 0.0
    %447 = vmatpush1.xpose.msra.mxu0 0.0
    %448 = vmatprep.subr.mxu0 0.0
    %449 = vmatpush1.xpose.msra.mxu0 0.0
    %450 = vmatprep.subr.mxu0 0.0
    %451 = vmatpush1.xpose.msra.mxu0 0.0
    %452 = vmatprep.subr.mxu0 0.0
    %453 = vmatpush1.xpose.msra.mxu0 0.0
    %454 = vmatprep.subr.mxu0 0.0
    %455 = vmatpush1.xpose.msra.mxu0 0.0
    %456 = vmatprep.subr.mxu0 0.0
    %457 = vmatpush1.xpose.msra.mxu0 0.0
    %458 = vmatprep.subr.mxu0 0.0
    %459 = vmatpush1.xpose.msra.mxu0 0.0
    %460 = vmatprep.subr.mxu0 0.0
    %461 = vmatpush1.xpose.msra.mxu0 0.0
    %462 = vmatprep.subr.mxu0 0.0
    %463 = vmatpush1.xpose.msra.mxu0 0.0
    %464 = vmatprep.subr.mxu0 0.0
    %465 = vmatpush1.xpose.msra.mxu0 0.0
    %466 = vmatprep.subr.mxu0 0.0
    %467 = vmatpush1.xpose.msra.mxu0 0.0
    %468 = vmatprep.subr.mxu0 0.0
    %469 = vmatpush1.xpose.msra.mxu0 0.0
    %470 = vmatprep.subr.mxu0 0.0
    %471 = vmatpush1.xpose.msra.mxu0 0.0
    %472 = vmatprep.subr.mxu0 0.0
    %473 = vmatpush1.xpose.msra.mxu0 0.0
    %474 = vmatprep.mubr.f32.mxu0 0.0
    %475 = vmatmul.mubr.f32.gmra.mrb[0].mxu0 %v405
    %v476 = vpop.f32.mrb[0].mxu0
    %v477 = vadd.f32 0.0, %v476
    %v478 = vpop.f32.mrb[0].mxu0
    %479 = vdwg.mxu0
    %v480 = vsel %vm179, %v160, 0
    %v483 = vsel %vm179, %v49, 0
    %485 = vmatprep.subr.mxu0 0.0
    %486 = vmatpush1.xpose.msra.mxu0 %v483
    %487 = vmatprep.subr.mxu0 0.0
    %488 = vmatpush1.xpose.msra.mxu0 0.0
    %489 = vmatprep.subr.mxu0 0.0
    %490 = vmatpush1.xpose.msra.mxu0 0.0
    %491 = vmatprep.subr.mxu0 0.0
    %492 = vmatpush1.xpose.msra.mxu0 0.0
    %493 = vmatprep.subr.mxu0 0.0
    %494 = vmatpush1.xpose.msra.mxu0 0.0
    %495 = vmatprep.subr.mxu0 0.0
    %496 = vmatpush1.xpose.msra.mxu0 0.0
    %497 = vmatprep.subr.mxu0 0.0
    %498 = vmatpush1.xpose.msra.mxu0 0.0
    %499 = vmatprep.subr.mxu0 0.0
    %500 = vmatpush1.xpose.msra.mxu0 0.0
    %501 = vmatprep.subr.mxu0 0.0
    %502 = vmatpush1.xpose.msra.mxu0 0.0
    %503 = vmatprep.subr.mxu0 0.0
    %504 = vmatpush1.xpose.msra.mxu0 0.0
    %505 = vmatprep.subr.mxu0 0.0
    %506 = vmatpush1.xpose.msra.mxu0 0.0
    %507 = vmatprep.subr.mxu0 0.0
    %508 = vmatpush1.xpose.msra.mxu0 0.0
    %509 = vmatprep.subr.mxu0 0.0
    %510 = vmatpush1.xpose.msra.mxu0 0.0
    %511 = vmatprep.subr.mxu0 0.0
    %512 = vmatpush1.xpose.msra.mxu0 0.0
    %513 = vmatprep.subr.mxu0 0.0
    %514 = vmatpush1.xpose.msra.mxu0 0.0
    %515 = vmatprep.subr.mxu0 0.0
    %516 = vmatpush1.xpose.msra.mxu0 0.0
    %517 = vmatprep.subr.mxu0 0.0
    %518 = vmatpush1.xpose.msra.mxu0 0.0
    %519 = vmatprep.subr.mxu0 0.0
    %520 = vmatpush1.xpose.msra.mxu0 0.0
    %521 = vmatprep.subr.mxu0 0.0
    %522 = vmatpush1.xpose.msra.mxu0 0.0
    %523 = vmatprep.subr.mxu0 0.0
    %524 = vmatpush1.xpose.msra.mxu0 0.0
    %525 = vmatprep.subr.mxu0 0.0
    %526 = vmatpush1.xpose.msra.mxu0 0.0
    %527 = vmatprep.subr.mxu0 0.0
    %528 = vmatpush1.xpose.msra.mxu0 0.0
    %529 = vmatprep.subr.mxu0 0.0
    %530 = vmatpush1.xpose.msra.mxu0 0.0
    %531 = vmatprep.subr.mxu0 0.0
    %532 = vmatpush1.xpose.msra.mxu0 0.0
    %533 = vmatprep.subr.mxu0 0.0
    %534 = vmatpush1.xpose.msra.mxu0 0.0
    %535 = vmatprep.subr.mxu0 0.0
    %536 = vmatpush1.xpose.msra.mxu0 0.0
    %537 = vmatprep.subr.mxu0 0.0
    %538 = vmatpush1.xpose.msra.mxu0 0.0
    %539 = vmatprep.subr.mxu0 0.0
    %540 = vmatpush1.xpose.msra.mxu0 0.0
    %541 = vmatprep.subr.mxu0 0.0
    %542 = vmatpush1.xpose.msra.mxu0 0.0
    %543 = vmatprep.subr.mxu0 0.0
    %544 = vmatpush1.xpose.msra.mxu0 0.0
    %545 = vmatprep.subr.mxu0 0.0
    %546 = vmatpush1.xpose.msra.mxu0 0.0
    %547 = vmatprep.subr.mxu0 0.0
    %548 = vmatpush1.xpose.msra.mxu0 0.0
    %549 = vmatprep.mubr.f32.mxu0 0.0
    %550 = vmatmul.mubr.f32.gmra.mrb[0].mxu0 %v480
    %v551 = vpop.f32.mrb[0].mxu0
    %v552 = vadd.f32 0.0, %v551
    %v553 = vpop.f32.mrb[0].mxu0
    %554 = vdwg.mxu0
    %v555 = vsel %vm179, %v174, 0
    %v558 = vsel %vm179, %v50, 0
    %560 = vmatprep.subr.mxu0 0.0
    %561 = vmatpush1.xpose.msra.mxu0 %v558
    %562 = vmatprep.subr.mxu0 0.0
    %563 = vmatpush1.xpose.msra.mxu0 0.0
    %564 = vmatprep.subr.mxu0 0.0
    %565 = vmatpush1.xpose.msra.mxu0 0.0
    %566 = vmatprep.subr.mxu0 0.0
    %567 = vmatpush1.xpose.msra.mxu0 0.0
    %568 = vmatprep.subr.mxu0 0.0
    %569 = vmatpush1.xpose.msra.mxu0 0.0
    %570 = vmatprep.subr.mxu0 0.0
    %571 = vmatpush1.xpose.msra.mxu0 0.0
    %572 = vmatprep.subr.mxu0 0.0
    %573 = vmatpush1.xpose.msra.mxu0 0.0
    %574 = vmatprep.subr.mxu0 0.0
    %575 = vmatpush1.xpose.msra.mxu0 0.0
    %576 = vmatprep.subr.mxu0 0.0
    %577 = vmatpush1.xpose.msra.mxu0 0.0
    %578 = vmatprep.subr.mxu0 0.0
    %579 = vmatpush1.xpose.msra.mxu0 0.0
    %580 = vmatprep.subr.mxu0 0.0
    %581 = vmatpush1.xpose.msra.mxu0 0.0
    %582 = vmatprep.subr.mxu0 0.0
    %583 = vmatpush1.xpose.msra.mxu0 0.0
    %584 = vmatprep.subr.mxu0 0.0
    %585 = vmatpush1.xpose.msra.mxu0 0.0
    %586 = vmatprep.subr.mxu0 0.0
    %587 = vmatpush1.xpose.msra.mxu0 0.0
    %588 = vmatprep.subr.mxu0 0.0
    %589 = vmatpush1.xpose.msra.mxu0 0.0
    %590 = vmatprep.subr.mxu0 0.0
    %591 = vmatpush1.xpose.msra.mxu0 0.0
    %592 = vmatprep.subr.mxu0 0.0
    %593 = vmatpush1.xpose.msra.mxu0 0.0
    %594 = vmatprep.subr.mxu0 0.0
    %595 = vmatpush1.xpose.msra.mxu0 0.0
    %596 = vmatprep.subr.mxu0 0.0
    %597 = vmatpush1.xpose.msra.mxu0 0.0
    %598 = vmatprep.subr.mxu0 0.0
    %599 = vmatpush1.xpose.msra.mxu0 0.0
    %600 = vmatprep.subr.mxu0 0.0
    %601 = vmatpush1.xpose.msra.mxu0 0.0
    %602 = vmatprep.subr.mxu0 0.0
    %603 = vmatpush1.xpose.msra.mxu0 0.0
    %604 = vmatprep.subr.mxu0 0.0
    %605 = vmatpush1.xpose.msra.mxu0 0.0
    %606 = vmatprep.subr.mxu0 0.0
    %607 = vmatpush1.xpose.msra.mxu0 0.0
    %608 = vmatprep.subr.mxu0 0.0
    %609 = vmatpush1.xpose.msra.mxu0 0.0
    %610 = vmatprep.subr.mxu0 0.0
    %611 = vmatpush1.xpose.msra.mxu0 0.0
    %612 = vmatprep.subr.mxu0 0.0
    %613 = vmatpush1.xpose.msra.mxu0 0.0
    %614 = vmatprep.subr.mxu0 0.0
    %615 = vmatpush1.xpose.msra.mxu0 0.0
    %616 = vmatprep.subr.mxu0 0.0
    %617 = vmatpush1.xpose.msra.mxu0 0.0
    %618 = vmatprep.subr.mxu0 0.0
    %619 = vmatpush1.xpose.msra.mxu0 0.0
    %620 = vmatprep.subr.mxu0 0.0
    %621 = vmatpush1.xpose.msra.mxu0 0.0
    %622 = vmatprep.subr.mxu0 0.0
    %623 = vmatpush1.xpose.msra.mxu0 0.0
    %624 = vmatprep.mubr.f32.mxu0 0.0
    %625 = vmatmul.mubr.f32.gmra.mrb[0].mxu0 %v555
    %v626 = vpop.f32.mrb[0].mxu0
    %v627 = vadd.f32 0.0, %v626
    %v628 = vpop.f32.mrb[0].mxu0
    %629 = vdwg.mxu0
    %v630 = vsel %vm179, %v176, 0
    %v633 = vsel %vm179, %v51, 0
    %635 = vmatprep.subr.mxu0 0.0
    %636 = vmatpush1.xpose.msra.mxu0 %v633
    %637 = vmatprep.subr.mxu0 0.0
    %638 = vmatpush1.xpose.msra.mxu0 0.0
    %639 = vmatprep.subr.mxu0 0.0
    %640 = vmatpush1.xpose.msra.mxu0 0.0
    %641 = vmatprep.subr.mxu0 0.0
    %642 = vmatpush1.xpose.msra.mxu0 0.0
    %643 = vmatprep.subr.mxu0 0.0
    %644 = vmatpush1.xpose.msra.mxu0 0.0
    %645 = vmatprep.subr.mxu0 0.0
    %646 = vmatpush1.xpose.msra.mxu0 0.0
    %647 = vmatprep.subr.mxu0 0.0
    %648 = vmatpush1.xpose.msra.mxu0 0.0
    %649 = vmatprep.subr.mxu0 0.0
    %650 = vmatpush1.xpose.msra.mxu0 0.0
    %651 = vmatprep.subr.mxu0 0.0
    %652 = vmatpush1.xpose.msra.mxu0 0.0
    %653 = vmatprep.subr.mxu0 0.0
    %654 = vmatpush1.xpose.msra.mxu0 0.0
    %655 = vmatprep.subr.mxu0 0.0
    %656 = vmatpush1.xpose.msra.mxu0 0.0
    %657 = vmatprep.subr.mxu0 0.0
    %658 = vmatpush1.xpose.msra.mxu0 0.0
    %659 = vmatprep.subr.mxu0 0.0
    %660 = vmatpush1.xpose.msra.mxu0 0.0
    %661 = vmatprep.subr.mxu0 0.0
    %662 = vmatpush1.xpose.msra.mxu0 0.0
    %663 = vmatprep.subr.mxu0 0.0
    %664 = vmatpush1.xpose.msra.mxu0 0.0
    %665 = vmatprep.subr.mxu0 0.0
    %666 = vmatpush1.xpose.msra.mxu0 0.0
    %667 = vmatprep.subr.mxu0 0.0
    %668 = vmatpush1.xpose.msra.mxu0 0.0
    %669 = vmatprep.subr.mxu0 0.0
    %670 = vmatpush1.xpose.msra.mxu0 0.0
    %671 = vmatprep.subr.mxu0 0.0
    %672 = vmatpush1.xpose.msra.mxu0 0.0
    %673 = vmatprep.subr.mxu0 0.0
    %674 = vmatpush1.xpose.msra.mxu0 0.0
    %675 = vmatprep.subr.mxu0 0.0
    %676 = vmatpush1.xpose.msra.mxu0 0.0
    %677 = vmatprep.subr.mxu0 0.0
    %678 = vmatpush1.xpose.msra.mxu0 0.0
    %679 = vmatprep.subr.mxu0 0.0
    %680 = vmatpush1.xpose.msra.mxu0 0.0
    %681 = vmatprep.subr.mxu0 0.0
    %682 = vmatpush1.xpose.msra.mxu0 0.0
    %683 = vmatprep.subr.mxu0 0.0
    %684 = vmatpush1.xpose.msra.mxu0 0.0
    %685 = vmatprep.subr.mxu0 0.0
    %686 = vmatpush1.xpose.msra.mxu0 0.0
    %687 = vmatprep.subr.mxu0 0.0
    %688 = vmatpush1.xpose.msra.mxu0 0.0
    %689 = vmatprep.subr.mxu0 0.0
    %690 = vmatpush1.xpose.msra.mxu0 0.0
    %691 = vmatprep.subr.mxu0 0.0
    %692 = vmatpush1.xpose.msra.mxu0 0.0
    %693 = vmatprep.subr.mxu0 0.0
    %694 = vmatpush1.xpose.msra.mxu0 0.0
    %695 = vmatprep.subr.mxu0 0.0
    %696 = vmatpush1.xpose.msra.mxu0 0.0
    %697 = vmatprep.subr.mxu0 0.0
    %698 = vmatpush1.xpose.msra.mxu0 0.0
    %699 = vmatprep.mubr.f32.mxu0 0.0
    %700 = vmatmul.mubr.f32.gmra.mrb[0].mxu0 %v630
    %v701 = vpop.f32.mrb[0].mxu0
    %v702 = vadd.f32 0.0, %v701
    %v703 = vpop.f32.mrb[0].mxu0
    %704 = vdwg.mxu0
    %v705 = vsel %vm179, %v178, 0
    %v708 = vsel %vm179, %v52, 0
    %710 = vmatprep.subr.mxu0 0.0
    %711 = vmatpush1.xpose.msra.mxu0 %v708
    %712 = vmatprep.subr.mxu0 0.0
    %713 = vmatpush1.xpose.msra.mxu0 0.0
    %714 = vmatprep.subr.mxu0 0.0
    %715 = vmatpush1.xpose.msra.mxu0 0.0
    %716 = vmatprep.subr.mxu0 0.0
    %717 = vmatpush1.xpose.msra.mxu0 0.0
    %718 = vmatprep.subr.mxu0 0.0
    %719 = vmatpush1.xpose.msra.mxu0 0.0
    %720 = vmatprep.subr.mxu0 0.0
    %721 = vmatpush1.xpose.msra.mxu0 0.0
    %722 = vmatprep.subr.mxu0 0.0
    %723 = vmatpush1.xpose.msra.mxu0 0.0
    %724 = vmatprep.subr.mxu0 0.0
    %725 = vmatpush1.xpose.msra.mxu0 0.0
    %726 = vmatprep.subr.mxu0 0.0
    %727 = vmatpush1.xpose.msra.mxu0 0.0
    %728 = vmatprep.subr.mxu0 0.0
    %729 = vmatpush1.xpose.msra.mxu0 0.0
    %730 = vmatprep.subr.mxu0 0.0
    %731 = vmatpush1.xpose.msra.mxu0 0.0
    %732 = vmatprep.subr.mxu0 0.0
    %733 = vmatpush1.xpose.msra.mxu0 0.0
    %734 = vmatprep.subr.mxu0 0.0
    %735 = vmatpush1.xpose.msra.mxu0 0.0
    %736 = vmatprep.subr.mxu0 0.0
    %737 = vmatpush1.xpose.msra.mxu0 0.0
    %738 = vmatprep.subr.mxu0 0.0
    %739 = vmatpush1.xpose.msra.mxu0 0.0
    %740 = vmatprep.subr.mxu0 0.0
    %741 = vmatpush1.xpose.msra.mxu0 0.0
    %742 = vmatprep.subr.mxu0 0.0
    %743 = vmatpush1.xpose.msra.mxu0 0.0
    %744 = vmatprep.subr.mxu0 0.0
    %745 = vmatpush1.xpose.msra.mxu0 0.0
    %746 = vmatprep.subr.mxu0 0.0
    %747 = vmatpush1.xpose.msra.mxu0 0.0
    %748 = vmatprep.subr.mxu0 0.0
    %749 = vmatpush1.xpose.msra.mxu0 0.0
    %750 = vmatprep.subr.mxu0 0.0
    %751 = vmatpush1.xpose.msra.mxu0 0.0
    %752 = vmatprep.subr.mxu0 0.0
    %753 = vmatpush1.xpose.msra.mxu0 0.0
    %754 = vmatprep.subr.mxu0 0.0
    %755 = vmatpush1.xpose.msra.mxu0 0.0
    %756 = vmatprep.subr.mxu0 0.0
    %757 = vmatpush1.xpose.msra.mxu0 0.0
    %758 = vmatprep.subr.mxu0 0.0
    %759 = vmatpush1.xpose.msra.mxu0 0.0
    %760 = vmatprep.subr.mxu0 0.0
    %761 = vmatpush1.xpose.msra.mxu0 0.0
    %762 = vmatprep.subr.mxu0 0.0
    %763 = vmatpush1.xpose.msra.mxu0 0.0
    %764 = vmatprep.subr.mxu0 0.0
    %765 = vmatpush1.xpose.msra.mxu0 0.0
    %766 = vmatprep.subr.mxu0 0.0
    %767 = vmatpush1.xpose.msra.mxu0 0.0
    %768 = vmatprep.subr.mxu0 0.0
    %769 = vmatpush1.xpose.msra.mxu0 0.0
    %770 = vmatprep.subr.mxu0 0.0
    %771 = vmatpush1.xpose.msra.mxu0 0.0
    %772 = vmatprep.subr.mxu0 0.0
    %773 = vmatpush1.xpose.msra.mxu0 0.0
    %774 = vmatprep.mubr.f32.mxu0 0.0
    %775 = vmatmul.mubr.f32.gmra.mrb[0].mxu0 %v705
    %v776 = vpop.f32.mrb[0].mxu0
    %v777 = vadd.f32 0.0, %v776
    %v778 = vpop.f32.mrb[0].mxu0
    %779 = vdwg.mxu0
    %v788 = vrot.slane %v327, 7
    %vm789 = vcmask 1041409
    %v790 = vsel %vm789, %v788, %v252
    %v791 = vrot.slane %v402, 6
    %vm792 = vcmask 1042434
    %v793 = vsel %vm792, %v791, %v790
    %v794 = vrot.slane %v477, 5
    %vm795 = vcmask 1043459
    %v796 = vsel %vm795, %v794, %v793
    %v797 = vrot.slane %v552, 4
    %vm798 = vcmask 1044484
    %v799 = vsel %vm798, %v797, %v796
    %v800 = vrot.slane %v627, 3
    %vm801 = vcmask 1045509
    %v802 = vsel %vm801, %v800, %v799
    %v803 = vrot.slane %v702, 2
    %vm804 = vcmask 1046534
    %v805 = vsel %vm804, %v803, %v802
    %v806 = vrot.slane %v777, 1
    %vm807 = vcmask 1047559
    %v808 = vsel %vm807, %v806, %v805
    %vm810 = vcmask 64512
    %v811 = vsel %vm810, %v808, -inf
    %812 = vmax.xlane.f32.xlu0 %v811
    %v813 = vpop.xlane.xlu0 %812
    %v815 = vrot.slane %v813, 1
    %v816 = vrot.slane %v813, 2
    %v817 = vrot.slane %v813, 3
    %v818 = vrot.slane %v813, 4
    %v819 = vrot.slane %v813, 5
    %v820 = vrot.slane %v813, 6
    %v821 = vrot.slane %v813, 7
    %v830 = vsub.f32 %v252, %v813
    %v831 = vsub.f32 %v327, %v815
    %v832 = vsub.f32 %v402, %v816
    %v833 = vsub.f32 %v477, %v817
    %v834 = vsub.f32 %v552, %v818
    %v835 = vsub.f32 %v627, %v819
    %v836 = vsub.f32 %v702, %v820
    %v837 = vsub.f32 %v777, %v821
    %v838 = vmul.f32 %v830, 1.442695
    %v839 = vpow.pop %v838
    %v840 = vmul.f32 %v831, 1.442695
    %v841 = vpow.pop %v840
    %v842 = vmul.f32 %v832, 1.442695
    %v843 = vpow.pop %v842
    %v844 = vmul.f32 %v833, 1.442695
    %v845 = vpow.pop %v844
    %v846 = vmul.f32 %v834, 1.442695
    %v847 = vpow.pop %v846
    %v848 = vmul.f32 %v835, 1.442695
    %v849 = vpow.pop %v848
    %v850 = vmul.f32 %v836, 1.442695
    %v851 = vpow.pop %v850
    %v852 = vmul.f32 %v837, 1.442695
    %v853 = vpow.pop %v852
    %v854 = vld [vmem:[%s2] sm:$0xff]
    %v856 = vrot.slane %v854, 1
    %v857 = vrot.slane %v854, 2
    %v858 = vrot.slane %v854, 3
    %v859 = vrot.slane %v854, 4
    %v860 = vrot.slane %v854, 5
    %v861 = vrot.slane %v854, 6
    %v862 = vrot.slane %v854, 7
    %v871 = vmul.f32 %v839, %v854
    %v872 = vmul.f32 %v841, %v856
    %v873 = vmul.f32 %v843, %v857
    %v874 = vmul.f32 %v845, %v858
    %v875 = vmul.f32 %v847, %v859
    %v876 = vmul.f32 %v849, %v860
    %v877 = vmul.f32 %v851, %v861
    %v878 = vmul.f32 %v853, %v862
    %v887 = vrot.slane %v872, 7
    %v888 = vsel %vm789, %v887, %v871
    %v889 = vrot.slane %v873, 6
    %v890 = vsel %vm792, %v889, %v888
    %v891 = vrot.slane %v874, 5
    %v892 = vsel %vm795, %v891, %v890
    %v893 = vrot.slane %v875, 4
    %v894 = vsel %vm798, %v893, %v892
    %v895 = vrot.slane %v876, 3
    %v896 = vsel %vm801, %v895, %v894
    %v897 = vrot.slane %v877, 2
    %v898 = vsel %vm804, %v897, %v896
    %v899 = vrot.slane %v878, 1
    %v900 = vsel %vm807, %v899, %v898
    %v902 = vsel %vm810, %v900, 0.0
    %903 = vadd.xlane.f32.xlu0 %v902
    %v904 = vpop.xlane.xlu0 %903
    %v913 = vrot.slane %v841, 7
    %v914 = vsel %vm789, %v913, %v839
    %v915 = vrot.slane %v843, 6
    %v916 = vsel %vm792, %v915, %v914
    %v917 = vrot.slane %v845, 5
    %v918 = vsel %vm795, %v917, %v916
    %v919 = vrot.slane %v847, 4
    %v920 = vsel %vm798, %v919, %v918
    %v921 = vrot.slane %v849, 3
    %v922 = vsel %vm801, %v921, %v920
    %v923 = vrot.slane %v851, 2
    %v924 = vsel %vm804, %v923, %v922
    %v925 = vrot.slane %v853, 1
    %v926 = vsel %vm807, %v925, %v924
    %v928 = vsel %vm810, %v926, 0.0
    %929 = vadd.xlane.f32.xlu0 %v928
    %v930 = vpop.xlane.xlu0 %929
    %v931 = vmul.f32 %v930, 1e-08
    %v932 = vadd.f32 %v904, %v931
    %v934 = vrot.slane %v932, 1
    %v935 = vrot.slane %v932, 2
    %v936 = vrot.slane %v932, 3
    %v937 = vrot.slane %v932, 4
    %v938 = vrot.slane %v932, 5
    %v939 = vrot.slane %v932, 6
    %v940 = vrot.slane %v932, 7
    %v949 = vrcp.pop %v932
    %v950 = vmul.f32 %v871, %v949
    %v951 = vrcp.pop %v934
    %v952 = vmul.f32 %v872, %v951
    %v953 = vrcp.pop %v935
    %v954 = vmul.f32 %v873, %v953
    %v955 = vrcp.pop %v936
    %v956 = vmul.f32 %v874, %v955
    %v957 = vrcp.pop %v937
    %v958 = vmul.f32 %v875, %v957
    %v959 = vrcp.pop %v938
    %v960 = vmul.f32 %v876, %v959
    %v961 = vrcp.pop %v939
    %v962 = vmul.f32 %v877, %v961
    %v963 = vrcp.pop %v940
    %v964 = vmul.f32 %v878, %v963
    %v966 = vsel %vm810, %v950, 0
    %968 = vmatprep.subr.mxu0 0.0
    %969 = vmatpush1.msra.mxu0 %v45
    %970 = vmatprep.subr.mxu0 0.0
    %971 = vmatpush1.msra.mxu0 0.0
    %972 = vmatprep.subr.mxu0 0.0
    %973 = vmatpush1.msra.mxu0 0.0
    %974 = vmatprep.subr.mxu0 0.0
    %975 = vmatpush1.msra.mxu0 0.0
    %976 = vmatprep.subr.mxu0 0.0
    %977 = vmatpush1.msra.mxu0 0.0
    %978 = vmatprep.subr.mxu0 0.0
    %979 = vmatpush1.msra.mxu0 0.0
    %980 = vmatprep.subr.mxu0 0.0
    %981 = vmatpush1.msra.mxu0 0.0
    %982 = vmatprep.subr.mxu0 0.0
    %983 = vmatpush1.msra.mxu0 0.0
    %984 = vmatprep.subr.mxu0 0.0
    %985 = vmatpush1.msra.mxu0 0.0
    %986 = vmatprep.subr.mxu0 0.0
    %987 = vmatpush1.msra.mxu0 0.0
    %988 = vmatprep.subr.mxu0 0.0
    %989 = vmatpush1.msra.mxu0 0.0
    %990 = vmatprep.subr.mxu0 0.0
    %991 = vmatpush1.msra.mxu0 0.0
    %992 = vmatprep.subr.mxu0 0.0
    %993 = vmatpush1.msra.mxu0 0.0
    %994 = vmatprep.subr.mxu0 0.0
    %995 = vmatpush1.msra.mxu0 0.0
    %996 = vmatprep.subr.mxu0 0.0
    %997 = vmatpush1.msra.mxu0 0.0
    %998 = vmatprep.subr.mxu0 0.0
    %999 = vmatpush1.msra.mxu0 0.0
    %1000 = vmatprep.subr.mxu0 0.0
    %1001 = vmatpush1.msra.mxu0 0.0
    %1002 = vmatprep.subr.mxu0 0.0
    %1003 = vmatpush1.msra.mxu0 0.0
    %1004 = vmatprep.subr.mxu0 0.0
    %1005 = vmatpush1.msra.mxu0 0.0
    %1006 = vmatprep.subr.mxu0 0.0
    %1007 = vmatpush1.msra.mxu0 0.0
    %1008 = vmatprep.subr.mxu0 0.0
    %1009 = vmatpush1.msra.mxu0 0.0
    %1010 = vmatprep.subr.mxu0 0.0
    %1011 = vmatpush1.msra.mxu0 0.0
    %1012 = vmatprep.subr.mxu0 0.0
    %1013 = vmatpush1.msra.mxu0 0.0
    %1014 = vmatprep.subr.mxu0 0.0
    %1015 = vmatpush1.msra.mxu0 0.0
    %1016 = vmatprep.subr.mxu0 0.0
    %1017 = vmatpush1.msra.mxu0 0.0
    %1018 = vmatprep.subr.mxu0 0.0
    %1019 = vmatpush1.msra.mxu0 0.0
    %1020 = vmatprep.subr.mxu0 0.0
    %1021 = vmatpush1.msra.mxu0 0.0
    %1022 = vmatprep.subr.mxu0 0.0
    %1023 = vmatpush1.msra.mxu0 0.0
    %1024 = vmatprep.subr.mxu0 0.0
    %1025 = vmatpush1.msra.mxu0 0.0
    %1026 = vmatprep.subr.mxu0 0.0
    %1027 = vmatpush1.msra.mxu0 0.0
    %1028 = vmatprep.subr.mxu0 0.0
    %1029 = vmatpush1.msra.mxu0 0.0
    %1030 = vmatprep.subr.mxu0 0.0
    %1031 = vmatpush1.msra.mxu0 0.0
    %1032 = vmatprep.mubr.f32.mxu0 0.0
    %1033 = vmatmul.mubr.f32.gmra.mrb[0].mxu0 %v966
    %v1034 = vpop.f32.mrb[0].mxu0
    %v1035 = vadd.f32 0.0, %v1034
    %v1036 = vpop.f32.mrb[0].mxu0
    %1037 = vdwg.mxu0
    %v1039 = vsel %vm810, %v952, 0
    %1041 = vmatprep.subr.mxu0 0.0
    %1042 = vmatpush1.msra.mxu0 %v46
    %1043 = vmatprep.subr.mxu0 0.0
    %1044 = vmatpush1.msra.mxu0 0.0
    %1045 = vmatprep.subr.mxu0 0.0
    %1046 = vmatpush1.msra.mxu0 0.0
    %1047 = vmatprep.subr.mxu0 0.0
    %1048 = vmatpush1.msra.mxu0 0.0
    %1049 = vmatprep.subr.mxu0 0.0
    %1050 = vmatpush1.msra.mxu0 0.0
    %1051 = vmatprep.subr.mxu0 0.0
    %1052 = vmatpush1.msra.mxu0 0.0
    %1053 = vmatprep.subr.mxu0 0.0
    %1054 = vmatpush1.msra.mxu0 0.0
    %1055 = vmatprep.subr.mxu0 0.0
    %1056 = vmatpush1.msra.mxu0 0.0
    %1057 = vmatprep.subr.mxu0 0.0
    %1058 = vmatpush1.msra.mxu0 0.0
    %1059 = vmatprep.subr.mxu0 0.0
    %1060 = vmatpush1.msra.mxu0 0.0
    %1061 = vmatprep.subr.mxu0 0.0
    %1062 = vmatpush1.msra.mxu0 0.0
    %1063 = vmatprep.subr.mxu0 0.0
    %1064 = vmatpush1.msra.mxu0 0.0
    %1065 = vmatprep.subr.mxu0 0.0
    %1066 = vmatpush1.msra.mxu0 0.0
    %1067 = vmatprep.subr.mxu0 0.0
    %1068 = vmatpush1.msra.mxu0 0.0
    %1069 = vmatprep.subr.mxu0 0.0
    %1070 = vmatpush1.msra.mxu0 0.0
    %1071 = vmatprep.subr.mxu0 0.0
    %1072 = vmatpush1.msra.mxu0 0.0
    %1073 = vmatprep.subr.mxu0 0.0
    %1074 = vmatpush1.msra.mxu0 0.0
    %1075 = vmatprep.subr.mxu0 0.0
    %1076 = vmatpush1.msra.mxu0 0.0
    %1077 = vmatprep.subr.mxu0 0.0
    %1078 = vmatpush1.msra.mxu0 0.0
    %1079 = vmatprep.subr.mxu0 0.0
    %1080 = vmatpush1.msra.mxu0 0.0
    %1081 = vmatprep.subr.mxu0 0.0
    %1082 = vmatpush1.msra.mxu0 0.0
    %1083 = vmatprep.subr.mxu0 0.0
    %1084 = vmatpush1.msra.mxu0 0.0
    %1085 = vmatprep.subr.mxu0 0.0
    %1086 = vmatpush1.msra.mxu0 0.0
    %1087 = vmatprep.subr.mxu0 0.0
    %1088 = vmatpush1.msra.mxu0 0.0
    %1089 = vmatprep.subr.mxu0 0.0
    %1090 = vmatpush1.msra.mxu0 0.0
    %1091 = vmatprep.subr.mxu0 0.0
    %1092 = vmatpush1.msra.mxu0 0.0
    %1093 = vmatprep.subr.mxu0 0.0
    %1094 = vmatpush1.msra.mxu0 0.0
    %1095 = vmatprep.subr.mxu0 0.0
    %1096 = vmatpush1.msra.mxu0 0.0
    %1097 = vmatprep.subr.mxu0 0.0
    %1098 = vmatpush1.msra.mxu0 0.0
    %1099 = vmatprep.subr.mxu0 0.0
    %1100 = vmatpush1.msra.mxu0 0.0
    %1101 = vmatprep.subr.mxu0 0.0
    %1102 = vmatpush1.msra.mxu0 0.0
    %1103 = vmatprep.subr.mxu0 0.0
    %1104 = vmatpush1.msra.mxu0 0.0
    %1105 = vmatprep.mubr.f32.mxu0 0.0
    %1106 = vmatmul.mubr.f32.gmra.mrb[0].mxu0 %v1039
    %v1107 = vpop.f32.mrb[0].mxu0
    %v1108 = vadd.f32 0.0, %v1107
    %v1109 = vpop.f32.mrb[0].mxu0
    %1110 = vdwg.mxu0
    %v1112 = vsel %vm810, %v954, 0
    %1114 = vmatprep.subr.mxu0 0.0
    %1115 = vmatpush1.msra.mxu0 %v47
    %1116 = vmatprep.subr.mxu0 0.0
    %1117 = vmatpush1.msra.mxu0 0.0
    %1118 = vmatprep.subr.mxu0 0.0
    %1119 = vmatpush1.msra.mxu0 0.0
    %1120 = vmatprep.subr.mxu0 0.0
    %1121 = vmatpush1.msra.mxu0 0.0
    %1122 = vmatprep.subr.mxu0 0.0
    %1123 = vmatpush1.msra.mxu0 0.0
    %1124 = vmatprep.subr.mxu0 0.0
    %1125 = vmatpush1.msra.mxu0 0.0
    %1126 = vmatprep.subr.mxu0 0.0
    %1127 = vmatpush1.msra.mxu0 0.0
    %1128 = vmatprep.subr.mxu0 0.0
    %1129 = vmatpush1.msra.mxu0 0.0
    %1130 = vmatprep.subr.mxu0 0.0
    %1131 = vmatpush1.msra.mxu0 0.0
    %1132 = vmatprep.subr.mxu0 0.0
    %1133 = vmatpush1.msra.mxu0 0.0
    %1134 = vmatprep.subr.mxu0 0.0
    %1135 = vmatpush1.msra.mxu0 0.0
    %1136 = vmatprep.subr.mxu0 0.0
    %1137 = vmatpush1.msra.mxu0 0.0
    %1138 = vmatprep.subr.mxu0 0.0
    %1139 = vmatpush1.msra.mxu0 0.0
    %1140 = vmatprep.subr.mxu0 0.0
    %1141 = vmatpush1.msra.mxu0 0.0
    %1142 = vmatprep.subr.mxu0 0.0
    %1143 = vmatpush1.msra.mxu0 0.0
    %1144 = vmatprep.subr.mxu0 0.0
    %1145 = vmatpush1.msra.mxu0 0.0
    %1146 = vmatprep.subr.mxu0 0.0
    %1147 = vmatpush1.msra.mxu0 0.0
    %1148 = vmatprep.subr.mxu0 0.0
    %1149 = vmatpush1.msra.mxu0 0.0
    %1150 = vmatprep.subr.mxu0 0.0
    %1151 = vmatpush1.msra.mxu0 0.0
    %1152 = vmatprep.subr.mxu0 0.0
    %1153 = vmatpush1.msra.mxu0 0.0
    %1154 = vmatprep.subr.mxu0 0.0
    %1155 = vmatpush1.msra.mxu0 0.0
    %1156 = vmatprep.subr.mxu0 0.0
    %1157 = vmatpush1.msra.mxu0 0.0
    %1158 = vmatprep.subr.mxu0 0.0
    %1159 = vmatpush1.msra.mxu0 0.0
    %1160 = vmatprep.subr.mxu0 0.0
    %1161 = vmatpush1.msra.mxu0 0.0
    %1162 = vmatprep.subr.mxu0 0.0
    %1163 = vmatpush1.msra.mxu0 0.0
    %1164 = vmatprep.subr.mxu0 0.0
    %1165 = vmatpush1.msra.mxu0 0.0
    %1166 = vmatprep.subr.mxu0 0.0
    %1167 = vmatpush1.msra.mxu0 0.0
    %1168 = vmatprep.subr.mxu0 0.0
    %1169 = vmatpush1.msra.mxu0 0.0
    %1170 = vmatprep.subr.mxu0 0.0
    %1171 = vmatpush1.msra.mxu0 0.0
    %1172 = vmatprep.subr.mxu0 0.0
    %1173 = vmatpush1.msra.mxu0 0.0
    %1174 = vmatprep.subr.mxu0 0.0
    %1175 = vmatpush1.msra.mxu0 0.0
    %1176 = vmatprep.subr.mxu0 0.0
    %1177 = vmatpush1.msra.mxu0 0.0
    %1178 = vmatprep.mubr.f32.mxu0 0.0
    %1179 = vmatmul.mubr.f32.gmra.mrb[0].mxu0 %v1112
    %v1180 = vpop.f32.mrb[0].mxu0
    %v1181 = vadd.f32 0.0, %v1180
    %v1182 = vpop.f32.mrb[0].mxu0
    %1183 = vdwg.mxu0
    %v1185 = vsel %vm810, %v956, 0
    %1187 = vmatprep.subr.mxu0 0.0
    %1188 = vmatpush1.msra.mxu0 %v48
    %1189 = vmatprep.subr.mxu0 0.0
    %1190 = vmatpush1.msra.mxu0 0.0
    %1191 = vmatprep.subr.mxu0 0.0
    %1192 = vmatpush1.msra.mxu0 0.0
    %1193 = vmatprep.subr.mxu0 0.0
    %1194 = vmatpush1.msra.mxu0 0.0
    %1195 = vmatprep.subr.mxu0 0.0
    %1196 = vmatpush1.msra.mxu0 0.0
    %1197 = vmatprep.subr.mxu0 0.0
    %1198 = vmatpush1.msra.mxu0 0.0
    %1199 = vmatprep.subr.mxu0 0.0
    %1200 = vmatpush1.msra.mxu0 0.0
    %1201 = vmatprep.subr.mxu0 0.0
    %1202 = vmatpush1.msra.mxu0 0.0
    %1203 = vmatprep.subr.mxu0 0.0
    %1204 = vmatpush1.msra.mxu0 0.0
    %1205 = vmatprep.subr.mxu0 0.0
    %1206 = vmatpush1.msra.mxu0 0.0
    %1207 = vmatprep.subr.mxu0 0.0
    %1208 = vmatpush1.msra.mxu0 0.0
    %1209 = vmatprep.subr.mxu0 0.0
    %1210 = vmatpush1.msra.mxu0 0.0
    %1211 = vmatprep.subr.mxu0 0.0
    %1212 = vmatpush1.msra.mxu0 0.0
    %1213 = vmatprep.subr.mxu0 0.0
    %1214 = vmatpush1.msra.mxu0 0.0
    %1215 = vmatprep.subr.mxu0 0.0
    %1216 = vmatpush1.msra.mxu0 0.0
    %1217 = vmatprep.subr.mxu0 0.0
    %1218 = vmatpush1.msra.mxu0 0.0
    %1219 = vmatprep.subr.mxu0 0.0
    %1220 = vmatpush1.msra.mxu0 0.0
    %1221 = vmatprep.subr.mxu0 0.0
    %1222 = vmatpush1.msra.mxu0 0.0
    %1223 = vmatprep.subr.mxu0 0.0
    %1224 = vmatpush1.msra.mxu0 0.0
    %1225 = vmatprep.subr.mxu0 0.0
    %1226 = vmatpush1.msra.mxu0 0.0
    %1227 = vmatprep.subr.mxu0 0.0
    %1228 = vmatpush1.msra.mxu0 0.0
    %1229 = vmatprep.subr.mxu0 0.0
    %1230 = vmatpush1.msra.mxu0 0.0
    %1231 = vmatprep.subr.mxu0 0.0
    %1232 = vmatpush1.msra.mxu0 0.0
    %1233 = vmatprep.subr.mxu0 0.0
    %1234 = vmatpush1.msra.mxu0 0.0
    %1235 = vmatprep.subr.mxu0 0.0
    %1236 = vmatpush1.msra.mxu0 0.0
    %1237 = vmatprep.subr.mxu0 0.0
    %1238 = vmatpush1.msra.mxu0 0.0
    %1239 = vmatprep.subr.mxu0 0.0
    %1240 = vmatpush1.msra.mxu0 0.0
    %1241 = vmatprep.subr.mxu0 0.0
    %1242 = vmatpush1.msra.mxu0 0.0
    %1243 = vmatprep.subr.mxu0 0.0
    %1244 = vmatpush1.msra.mxu0 0.0
    %1245 = vmatprep.subr.mxu0 0.0
    %1246 = vmatpush1.msra.mxu0 0.0
    %1247 = vmatprep.subr.mxu0 0.0
    %1248 = vmatpush1.msra.mxu0 0.0
    %1249 = vmatprep.subr.mxu0 0.0
    %1250 = vmatpush1.msra.mxu0 0.0
    %1251 = vmatprep.mubr.f32.mxu0 0.0
    %1252 = vmatmul.mubr.f32.gmra.mrb[0].mxu0 %v1185
    %v1253 = vpop.f32.mrb[0].mxu0
    %v1254 = vadd.f32 0.0, %v1253
    %v1255 = vpop.f32.mrb[0].mxu0
    %1256 = vdwg.mxu0
    %v1258 = vsel %vm810, %v958, 0
    %1260 = vmatprep.subr.mxu0 0.0
    %1261 = vmatpush1.msra.mxu0 %v49
    %1262 = vmatprep.subr.mxu0 0.0
    %1263 = vmatpush1.msra.mxu0 0.0
    %1264 = vmatprep.subr.mxu0 0.0
    %1265 = vmatpush1.msra.mxu0 0.0
    %1266 = vmatprep.subr.mxu0 0.0
    %1267 = vmatpush1.msra.mxu0 0.0
    %1268 = vmatprep.subr.mxu0 0.0
    %1269 = vmatpush1.msra.mxu0 0.0
    %1270 = vmatprep.subr.mxu0 0.0
    %1271 = vmatpush1.msra.mxu0 0.0
    %1272 = vmatprep.subr.mxu0 0.0
    %1273 = vmatpush1.msra.mxu0 0.0
    %1274 = vmatprep.subr.mxu0 0.0
    %1275 = vmatpush1.msra.mxu0 0.0
    %1276 = vmatprep.subr.mxu0 0.0
    %1277 = vmatpush1.msra.mxu0 0.0
    %1278 = vmatprep.subr.mxu0 0.0
    %1279 = vmatpush1.msra.mxu0 0.0
    %1280 = vmatprep.subr.mxu0 0.0
    %1281 = vmatpush1.msra.mxu0 0.0
    %1282 = vmatprep.subr.mxu0 0.0
    %1283 = vmatpush1.msra.mxu0 0.0
    %1284 = vmatprep.subr.mxu0 0.0
    %1285 = vmatpush1.msra.mxu0 0.0
    %1286 = vmatprep.subr.mxu0 0.0
    %1287 = vmatpush1.msra.mxu0 0.0
    %1288 = vmatprep.subr.mxu0 0.0
    %1289 = vmatpush1.msra.mxu0 0.0
    %1290 = vmatprep.subr.mxu0 0.0
    %1291 = vmatpush1.msra.mxu0 0.0
    %1292 = vmatprep.subr.mxu0 0.0
    %1293 = vmatpush1.msra.mxu0 0.0
    %1294 = vmatprep.subr.mxu0 0.0
    %1295 = vmatpush1.msra.mxu0 0.0
    %1296 = vmatprep.subr.mxu0 0.0
    %1297 = vmatpush1.msra.mxu0 0.0
    %1298 = vmatprep.subr.mxu0 0.0
    %1299 = vmatpush1.msra.mxu0 0.0
    %1300 = vmatprep.subr.mxu0 0.0
    %1301 = vmatpush1.msra.mxu0 0.0
    %1302 = vmatprep.subr.mxu0 0.0
    %1303 = vmatpush1.msra.mxu0 0.0
    %1304 = vmatprep.subr.mxu0 0.0
    %1305 = vmatpush1.msra.mxu0 0.0
    %1306 = vmatprep.subr.mxu0 0.0
    %1307 = vmatpush1.msra.mxu0 0.0
    %1308 = vmatprep.subr.mxu0 0.0
    %1309 = vmatpush1.msra.mxu0 0.0
    %1310 = vmatprep.subr.mxu0 0.0
    %1311 = vmatpush1.msra.mxu0 0.0
    %1312 = vmatprep.subr.mxu0 0.0
    %1313 = vmatpush1.msra.mxu0 0.0
    %1314 = vmatprep.subr.mxu0 0.0
    %1315 = vmatpush1.msra.mxu0 0.0
    %1316 = vmatprep.subr.mxu0 0.0
    %1317 = vmatpush1.msra.mxu0 0.0
    %1318 = vmatprep.subr.mxu0 0.0
    %1319 = vmatpush1.msra.mxu0 0.0
    %1320 = vmatprep.subr.mxu0 0.0
    %1321 = vmatpush1.msra.mxu0 0.0
    %1322 = vmatprep.subr.mxu0 0.0
    %1323 = vmatpush1.msra.mxu0 0.0
    %1324 = vmatprep.mubr.f32.mxu0 0.0
    %1325 = vmatmul.mubr.f32.gmra.mrb[0].mxu0 %v1258
    %v1326 = vpop.f32.mrb[0].mxu0
    %v1327 = vadd.f32 0.0, %v1326
    %v1328 = vpop.f32.mrb[0].mxu0
    %1329 = vdwg.mxu0
    %v1331 = vsel %vm810, %v960, 0
    %1333 = vmatprep.subr.mxu0 0.0
    %1334 = vmatpush1.msra.mxu0 %v50
    %1335 = vmatprep.subr.mxu0 0.0
    %1336 = vmatpush1.msra.mxu0 0.0
    %1337 = vmatprep.subr.mxu0 0.0
    %1338 = vmatpush1.msra.mxu0 0.0
    %1339 = vmatprep.subr.mxu0 0.0
    %1340 = vmatpush1.msra.mxu0 0.0
    %1341 = vmatprep.subr.mxu0 0.0
    %1342 = vmatpush1.msra.mxu0 0.0
    %1343 = vmatprep.subr.mxu0 0.0
    %1344 = vmatpush1.msra.mxu0 0.0
    %1345 = vmatprep.subr.mxu0 0.0
    %1346 = vmatpush1.msra.mxu0 0.0
    %1347 = vmatprep.subr.mxu0 0.0
    %1348 = vmatpush1.msra.mxu0 0.0
    %1349 = vmatprep.subr.mxu0 0.0
    %1350 = vmatpush1.msra.mxu0 0.0
    %1351 = vmatprep.subr.mxu0 0.0
    %1352 = vmatpush1.msra.mxu0 0.0
    %1353 = vmatprep.subr.mxu0 0.0
    %1354 = vmatpush1.msra.mxu0 0.0
    %1355 = vmatprep.subr.mxu0 0.0
    %1356 = vmatpush1.msra.mxu0 0.0
    %1357 = vmatprep.subr.mxu0 0.0
    %1358 = vmatpush1.msra.mxu0 0.0
    %1359 = vmatprep.subr.mxu0 0.0
    %1360 = vmatpush1.msra.mxu0 0.0
    %1361 = vmatprep.subr.mxu0 0.0
    %1362 = vmatpush1.msra.mxu0 0.0
    %1363 = vmatprep.subr.mxu0 0.0
    %1364 = vmatpush1.msra.mxu0 0.0
    %1365 = vmatprep.subr.mxu0 0.0
    %1366 = vmatpush1.msra.mxu0 0.0
    %1367 = vmatprep.subr.mxu0 0.0
    %1368 = vmatpush1.msra.mxu0 0.0
    %1369 = vmatprep.subr.mxu0 0.0
    %1370 = vmatpush1.msra.mxu0 0.0
    %1371 = vmatprep.subr.mxu0 0.0
    %1372 = vmatpush1.msra.mxu0 0.0
    %1373 = vmatprep.subr.mxu0 0.0
    %1374 = vmatpush1.msra.mxu0 0.0
    %1375 = vmatprep.subr.mxu0 0.0
    %1376 = vmatpush1.msra.mxu0 0.0
    %1377 = vmatprep.subr.mxu0 0.0
    %1378 = vmatpush1.msra.mxu0 0.0
    %1379 = vmatprep.subr.mxu0 0.0
    %1380 = vmatpush1.msra.mxu0 0.0
    %1381 = vmatprep.subr.mxu0 0.0
    %1382 = vmatpush1.msra.mxu0 0.0
    %1383 = vmatprep.subr.mxu0 0.0
    %1384 = vmatpush1.msra.mxu0 0.0
    %1385 = vmatprep.subr.mxu0 0.0
    %1386 = vmatpush1.msra.mxu0 0.0
    %1387 = vmatprep.subr.mxu0 0.0
    %1388 = vmatpush1.msra.mxu0 0.0
    %1389 = vmatprep.subr.mxu0 0.0
    %1390 = vmatpush1.msra.mxu0 0.0
    %1391 = vmatprep.subr.mxu0 0.0
    %1392 = vmatpush1.msra.mxu0 0.0
    %1393 = vmatprep.subr.mxu0 0.0
    %1394 = vmatpush1.msra.mxu0 0.0
    %1395 = vmatprep.subr.mxu0 0.0
    %1396 = vmatpush1.msra.mxu0 0.0
    %1397 = vmatprep.mubr.f32.mxu0 0.0
    %1398 = vmatmul.mubr.f32.gmra.mrb[0].mxu0 %v1331
    %v1399 = vpop.f32.mrb[0].mxu0
    %v1400 = vadd.f32 0.0, %v1399
    %v1401 = vpop.f32.mrb[0].mxu0
    %1402 = vdwg.mxu0
    %v1404 = vsel %vm810, %v962, 0
    %1406 = vmatprep.subr.mxu0 0.0
    %1407 = vmatpush1.msra.mxu0 %v51
    %1408 = vmatprep.subr.mxu0 0.0
    %1409 = vmatpush1.msra.mxu0 0.0
    %1410 = vmatprep.subr.mxu0 0.0
    %1411 = vmatpush1.msra.mxu0 0.0
    %1412 = vmatprep.subr.mxu0 0.0
    %1413 = vmatpush1.msra.mxu0 0.0
    %1414 = vmatprep.subr.mxu0 0.0
    %1415 = vmatpush1.msra.mxu0 0.0
    %1416 = vmatprep.subr.mxu0 0.0
    %1417 = vmatpush1.msra.mxu0 0.0
    %1418 = vmatprep.subr.mxu0 0.0
    %1419 = vmatpush1.msra.mxu0 0.0
    %1420 = vmatprep.subr.mxu0 0.0
    %1421 = vmatpush1.msra.mxu0 0.0
    %1422 = vmatprep.subr.mxu0 0.0
    %1423 = vmatpush1.msra.mxu0 0.0
    %1424 = vmatprep.subr.mxu0 0.0
    %1425 = vmatpush1.msra.mxu0 0.0
    %1426 = vmatprep.subr.mxu0 0.0
    %1427 = vmatpush1.msra.mxu0 0.0
    %1428 = vmatprep.subr.mxu0 0.0
    %1429 = vmatpush1.msra.mxu0 0.0
    %1430 = vmatprep.subr.mxu0 0.0
    %1431 = vmatpush1.msra.mxu0 0.0
    %1432 = vmatprep.subr.mxu0 0.0
    %1433 = vmatpush1.msra.mxu0 0.0
    %1434 = vmatprep.subr.mxu0 0.0
    %1435 = vmatpush1.msra.mxu0 0.0
    %1436 = vmatprep.subr.mxu0 0.0
    %1437 = vmatpush1.msra.mxu0 0.0
    %1438 = vmatprep.subr.mxu0 0.0
    %1439 = vmatpush1.msra.mxu0 0.0
    %1440 = vmatprep.subr.mxu0 0.0
    %1441 = vmatpush1.msra.mxu0 0.0
    %1442 = vmatprep.subr.mxu0 0.0
    %1443 = vmatpush1.msra.mxu0 0.0
    %1444 = vmatprep.subr.mxu0 0.0
    %1445 = vmatpush1.msra.mxu0 0.0
    %1446 = vmatprep.subr.mxu0 0.0
    %1447 = vmatpush1.msra.mxu0 0.0
    %1448 = vmatprep.subr.mxu0 0.0
    %1449 = vmatpush1.msra.mxu0 0.0
    %1450 = vmatprep.subr.mxu0 0.0
    %1451 = vmatpush1.msra.mxu0 0.0
    %1452 = vmatprep.subr.mxu0 0.0
    %1453 = vmatpush1.msra.mxu0 0.0
    %1454 = vmatprep.subr.mxu0 0.0
    %1455 = vmatpush1.msra.mxu0 0.0
    %1456 = vmatprep.subr.mxu0 0.0
    %1457 = vmatpush1.msra.mxu0 0.0
    %1458 = vmatprep.subr.mxu0 0.0
    %1459 = vmatpush1.msra.mxu0 0.0
    %1460 = vmatprep.subr.mxu0 0.0
    %1461 = vmatpush1.msra.mxu0 0.0
    %1462 = vmatprep.subr.mxu0 0.0
    %1463 = vmatpush1.msra.mxu0 0.0
    %1464 = vmatprep.subr.mxu0 0.0
    %1465 = vmatpush1.msra.mxu0 0.0
    %1466 = vmatprep.subr.mxu0 0.0
    %1467 = vmatpush1.msra.mxu0 0.0
    %1468 = vmatprep.subr.mxu0 0.0
    %1469 = vmatpush1.msra.mxu0 0.0
    %1470 = vmatprep.mubr.f32.mxu0 0.0
    %1471 = vmatmul.mubr.f32.gmra.mrb[0].mxu0 %v1404
    %v1472 = vpop.f32.mrb[0].mxu0
    %v1473 = vadd.f32 0.0, %v1472
    %v1474 = vpop.f32.mrb[0].mxu0
    %1475 = vdwg.mxu0
    %v1477 = vsel %vm810, %v964, 0
    %1479 = vmatprep.subr.mxu0 0.0
    %1480 = vmatpush1.msra.mxu0 %v52
    %1481 = vmatprep.subr.mxu0 0.0
    %1482 = vmatpush1.msra.mxu0 0.0
    %1483 = vmatprep.subr.mxu0 0.0
    %1484 = vmatpush1.msra.mxu0 0.0
    %1485 = vmatprep.subr.mxu0 0.0
    %1486 = vmatpush1.msra.mxu0 0.0
    %1487 = vmatprep.subr.mxu0 0.0
    %1488 = vmatpush1.msra.mxu0 0.0
    %1489 = vmatprep.subr.mxu0 0.0
    %1490 = vmatpush1.msra.mxu0 0.0
    %1491 = vmatprep.subr.mxu0 0.0
    %1492 = vmatpush1.msra.mxu0 0.0
    %1493 = vmatprep.subr.mxu0 0.0
    %1494 = vmatpush1.msra.mxu0 0.0
    %1495 = vmatprep.subr.mxu0 0.0
    %1496 = vmatpush1.msra.mxu0 0.0
    %1497 = vmatprep.subr.mxu0 0.0
    %1498 = vmatpush1.msra.mxu0 0.0
    %1499 = vmatprep.subr.mxu0 0.0
    %1500 = vmatpush1.msra.mxu0 0.0
    %1501 = vmatprep.subr.mxu0 0.0
    %1502 = vmatpush1.msra.mxu0 0.0
    %1503 = vmatprep.subr.mxu0 0.0
    %1504 = vmatpush1.msra.mxu0 0.0
    %1505 = vmatprep.subr.mxu0 0.0
    %1506 = vmatpush1.msra.mxu0 0.0
    %1507 = vmatprep.subr.mxu0 0.0
    %1508 = vmatpush1.msra.mxu0 0.0
    %1509 = vmatprep.subr.mxu0 0.0
    %1510 = vmatpush1.msra.mxu0 0.0
    %1511 = vmatprep.subr.mxu0 0.0
    %1512 = vmatpush1.msra.mxu0 0.0
    %1513 = vmatprep.subr.mxu0 0.0
    %1514 = vmatpush1.msra.mxu0 0.0
    %1515 = vmatprep.subr.mxu0 0.0
    %1516 = vmatpush1.msra.mxu0 0.0
    %1517 = vmatprep.subr.mxu0 0.0
    %1518 = vmatpush1.msra.mxu0 0.0
    %1519 = vmatprep.subr.mxu0 0.0
    %1520 = vmatpush1.msra.mxu0 0.0
    %1521 = vmatprep.subr.mxu0 0.0
    %1522 = vmatpush1.msra.mxu0 0.0
    %1523 = vmatprep.subr.mxu0 0.0
    %1524 = vmatpush1.msra.mxu0 0.0
    %1525 = vmatprep.subr.mxu0 0.0
    %1526 = vmatpush1.msra.mxu0 0.0
    %1527 = vmatprep.subr.mxu0 0.0
    %1528 = vmatpush1.msra.mxu0 0.0
    %1529 = vmatprep.subr.mxu0 0.0
    %1530 = vmatpush1.msra.mxu0 0.0
    %1531 = vmatprep.subr.mxu0 0.0
    %1532 = vmatpush1.msra.mxu0 0.0
    %1533 = vmatprep.subr.mxu0 0.0
    %1534 = vmatpush1.msra.mxu0 0.0
    %1535 = vmatprep.subr.mxu0 0.0
    %1536 = vmatpush1.msra.mxu0 0.0
    %1537 = vmatprep.subr.mxu0 0.0
    %1538 = vmatpush1.msra.mxu0 0.0
    %1539 = vmatprep.subr.mxu0 0.0
    %1540 = vmatpush1.msra.mxu0 0.0
    %1541 = vmatprep.subr.mxu0 0.0
    %1542 = vmatpush1.msra.mxu0 0.0
    %1543 = vmatprep.mubr.f32.mxu0 0.0
    %1544 = vmatmul.mubr.f32.gmra.mrb[0].mxu0 %v1477
    %v1545 = vpop.f32.mrb[0].mxu0
    %v1546 = vadd.f32 0.0, %v1545
    %v1547 = vpop.f32.mrb[0].mxu0
    %1548 = vdwg.mxu0
    %v1549 = vld [vmem:[%s4] sm:$0xff]
    %v1550 = vld [vmem:[%s4 + $0x8] sm:$0xff]
    %v1551 = vld [vmem:[%s4 + $0x10] sm:$0xff]
    %v1552 = vld [vmem:[%s4 + $0x18] sm:$0xff]
    %v1553 = vld [vmem:[%s5] sm:$0xff]
    %v1554 = vld [vmem:[%s5 + $0x8] sm:$0xff]
    %1555 = vmatprep.subr.mxu0 0.0
    %1556 = vmatpush1.msra.mxu0 %v1553
    %1557 = vmatprep.subr.mxu0 0.0
    %1558 = vmatpush1.msra.mxu0 %v1554
    %1559 = vmatprep.subr.mxu0 0.0
    %1560 = vmatpush1.msra.mxu0 0.0
    %1561 = vmatprep.subr.mxu0 0.0
    %1562 = vmatpush1.msra.mxu0 0.0
    %1563 = vmatprep.subr.mxu0 0.0
    %1564 = vmatpush1.msra.mxu0 0.0
    %1565 = vmatprep.subr.mxu0 0.0
    %1566 = vmatpush1.msra.mxu0 0.0
    %1567 = vmatprep.subr.mxu0 0.0
    %1568 = vmatpush1.msra.mxu0 0.0
    %1569 = vmatprep.subr.mxu0 0.0
    %1570 = vmatpush1.msra.mxu0 0.0
    %1571 = vmatprep.subr.mxu0 0.0
    %1572 = vmatpush1.msra.mxu0 0.0
    %1573 = vmatprep.subr.mxu0 0.0
    %1574 = vmatpush1.msra.mxu0 0.0
    %1575 = vmatprep.subr.mxu0 0.0
    %1576 = vmatpush1.msra.mxu0 0.0
    %1577 = vmatprep.subr.mxu0 0.0
    %1578 = vmatpush1.msra.mxu0 0.0
    %1579 = vmatprep.subr.mxu0 0.0
    %1580 = vmatpush1.msra.mxu0 0.0
    %1581 = vmatprep.subr.mxu0 0.0
    %1582 = vmatpush1.msra.mxu0 0.0
    %1583 = vmatprep.subr.mxu0 0.0
    %1584 = vmatpush1.msra.mxu0 0.0
    %1585 = vmatprep.subr.mxu0 0.0
    %1586 = vmatpush1.msra.mxu0 0.0
    %1587 = vmatprep.subr.mxu0 0.0
    %1588 = vmatpush1.msra.mxu0 0.0
    %1589 = vmatprep.subr.mxu0 0.0
    %1590 = vmatpush1.msra.mxu0 0.0
    %1591 = vmatprep.subr.mxu0 0.0
    %1592 = vmatpush1.msra.mxu0 0.0
    %1593 = vmatprep.subr.mxu0 0.0
    %1594 = vmatpush1.msra.mxu0 0.0
    %1595 = vmatprep.subr.mxu0 0.0
    %1596 = vmatpush1.msra.mxu0 0.0
    %1597 = vmatprep.subr.mxu0 0.0
    %1598 = vmatpush1.msra.mxu0 0.0
    %1599 = vmatprep.subr.mxu0 0.0
    %1600 = vmatpush1.msra.mxu0 0.0
    %1601 = vmatprep.subr.mxu0 0.0
    %1602 = vmatpush1.msra.mxu0 0.0
    %1603 = vmatprep.subr.mxu0 0.0
    %1604 = vmatpush1.msra.mxu0 0.0
    %1605 = vmatprep.subr.mxu0 0.0
    %1606 = vmatpush1.msra.mxu0 0.0
    %1607 = vmatprep.subr.mxu0 0.0
    %1608 = vmatpush1.msra.mxu0 0.0
    %1609 = vmatprep.subr.mxu0 0.0
    %1610 = vmatpush1.msra.mxu0 0.0
    %1611 = vmatprep.subr.mxu0 0.0
    %1612 = vmatpush1.msra.mxu0 0.0
    %1613 = vmatprep.subr.mxu0 0.0
    %1614 = vmatpush1.msra.mxu0 0.0
    %1615 = vmatprep.subr.mxu0 0.0
    %1616 = vmatpush1.msra.mxu0 0.0
    %1617 = vmatprep.subr.mxu0 0.0
    %1618 = vmatpush1.msra.mxu0 0.0
    %1619 = vmatprep.mubr.f32.mxu0 0.0
    %1620 = vmatmul.mubr.f32.gmra.mrb[0].mxu0 %v57
    %v1621 = vpop.f32.mrb[0].mxu0
    %v1622 = vadd.f32 0.0, %v1621
    %v1623 = vpop.f32.mrb[0].mxu0
    %1624 = vdwg.mxu0
    %v1633 = vrot.slane %v1108, 7
    %v1634 = vsel %vm789, %v1633, %v1035
    %v1635 = vrot.slane %v1181, 6
    %v1636 = vsel %vm792, %v1635, %v1634
    %v1637 = vrot.slane %v1254, 5
    %v1638 = vsel %vm795, %v1637, %v1636
    %v1639 = vrot.slane %v1327, 4
    %v1640 = vsel %vm798, %v1639, %v1638
    %v1641 = vrot.slane %v1400, 3
    %v1642 = vsel %vm801, %v1641, %v1640
    %v1643 = vrot.slane %v1473, 2
    %v1644 = vsel %vm804, %v1643, %v1642
    %v1645 = vrot.slane %v1546, 1
    %v1646 = vsel %vm807, %v1645, %v1644
    %v1647 = vsel %vm179, %v1646, 0
    %1649 = vmatprep.subr.mxu0 0.0
    %1650 = vmatpush1.msra.mxu0 %v1549
    %1651 = vmatprep.subr.mxu0 0.0
    %1652 = vmatpush1.msra.mxu0 %v1550
    %1653 = vmatprep.subr.mxu0 0.0
    %1654 = vmatpush1.msra.mxu0 %v1551
    %1655 = vmatprep.subr.mxu0 0.0
    %1656 = vmatpush1.msra.mxu0 %v1552
    %1657 = vmatprep.subr.mxu0 0.0
    %1658 = vmatpush1.msra.mxu0 0.0
    %1659 = vmatprep.subr.mxu0 0.0
    %1660 = vmatpush1.msra.mxu0 0.0
    %1661 = vmatprep.subr.mxu0 0.0
    %1662 = vmatpush1.msra.mxu0 0.0
    %1663 = vmatprep.subr.mxu0 0.0
    %1664 = vmatpush1.msra.mxu0 0.0
    %1665 = vmatprep.subr.mxu0 0.0
    %1666 = vmatpush1.msra.mxu0 0.0
    %1667 = vmatprep.subr.mxu0 0.0
    %1668 = vmatpush1.msra.mxu0 0.0
    %1669 = vmatprep.subr.mxu0 0.0
    %1670 = vmatpush1.msra.mxu0 0.0
    %1671 = vmatprep.subr.mxu0 0.0
    %1672 = vmatpush1.msra.mxu0 0.0
    %1673 = vmatprep.subr.mxu0 0.0
    %1674 = vmatpush1.msra.mxu0 0.0
    %1675 = vmatprep.subr.mxu0 0.0
    %1676 = vmatpush1.msra.mxu0 0.0
    %1677 = vmatprep.subr.mxu0 0.0
    %1678 = vmatpush1.msra.mxu0 0.0
    %1679 = vmatprep.subr.mxu0 0.0
    %1680 = vmatpush1.msra.mxu0 0.0
    %1681 = vmatprep.subr.mxu0 0.0
    %1682 = vmatpush1.msra.mxu0 0.0
    %1683 = vmatprep.subr.mxu0 0.0
    %1684 = vmatpush1.msra.mxu0 0.0
    %1685 = vmatprep.subr.mxu0 0.0
    %1686 = vmatpush1.msra.mxu0 0.0
    %1687 = vmatprep.subr.mxu0 0.0
    %1688 = vmatpush1.msra.mxu0 0.0
    %1689 = vmatprep.subr.mxu0 0.0
    %1690 = vmatpush1.msra.mxu0 0.0
    %1691 = vmatprep.subr.mxu0 0.0
    %1692 = vmatpush1.msra.mxu0 0.0
    %1693 = vmatprep.subr.mxu0 0.0
    %1694 = vmatpush1.msra.mxu0 0.0
    %1695 = vmatprep.subr.mxu0 0.0
    %1696 = vmatpush1.msra.mxu0 0.0
    %1697 = vmatprep.subr.mxu0 0.0
    %1698 = vmatpush1.msra.mxu0 0.0
    %1699 = vmatprep.subr.mxu0 0.0
    %1700 = vmatpush1.msra.mxu0 0.0
    %1701 = vmatprep.subr.mxu0 0.0
    %1702 = vmatpush1.msra.mxu0 0.0
    %1703 = vmatprep.subr.mxu0 0.0
    %1704 = vmatpush1.msra.mxu0 0.0
    %1705 = vmatprep.subr.mxu0 0.0
    %1706 = vmatpush1.msra.mxu0 0.0
    %1707 = vmatprep.subr.mxu0 0.0
    %1708 = vmatpush1.msra.mxu0 0.0
    %1709 = vmatprep.subr.mxu0 0.0
    %1710 = vmatpush1.msra.mxu0 0.0
    %1711 = vmatprep.subr.mxu0 0.0
    %1712 = vmatpush1.msra.mxu0 0.0
    %1713 = vmatprep.mubr.f32.mxu0 0.0
    %1714 = vmatmul.mubr.f32.gmra.mrb[0].mxu0 %v1647
    %v1715 = vpop.f32.mrb[0].mxu0
    %v1716 = vadd.f32 %v1622, %v1715
    %v1717 = vpop.f32.mrb[0].mxu0
    %1718 = vdwg.mxu0
    %v1719 = vld [vmem:[%s6] sm:$0x1]
    %v1721 = vlaneseq
    %v1722 = vshrl.u32 %v1721, 7
    %v1723 = vsub.s32 0, %v1722
    %v1724 = vrot.slane %v1719, %v1723
    %v1726 = vadd.f32 %v1716, %v1724
    %v1727 = vtanh.pop %v1726
    %1728 = vst.msk [vmem:[#allocation5] sm:$0xff] %vm55, %v1727
    %v1729 = vrot.slane %v952, 7
    %v1730 = vsel %vm789, %v1729, %v950
    %v1731 = vrot.slane %v954, 6
    %v1732 = vsel %vm792, %v1731, %v1730
    %v1733 = vrot.slane %v956, 5
    %v1734 = vsel %vm795, %v1733, %v1732
    %v1735 = vrot.slane %v958, 4
    %v1736 = vsel %vm798, %v1735, %v1734
    %v1737 = vrot.slane %v960, 3
    %v1738 = vsel %vm801, %v1737, %v1736
    %v1739 = vrot.slane %v962, 2
    %v1740 = vsel %vm804, %v1739, %v1738
    %v1741 = vrot.slane %v964, 1
    %v1742 = vsel %vm807, %v1741, %v1740
    %1744 = vst.msk [vmem:[#allocation6] sm:$0xff] %vm810, %v1742
    // Predicated region
    $region34: #{tpu_custom_call.1} parent=1 // pred_check
      _
    $region35: #{tpu_custom_call.1} parent=1 // pred_check_branch
      %1746 = sbr.rel (0) target = $region37
    $region36: #{tpu_custom_call.1} parent=1 // pred_region
      %s1748 = ssub.s32 128, 128
      %1749 = vsyncadd [#allocation4], %s1748
      %s1751 = sshll.u32 [#allocation5], 4
      %s1752 = int_to_ptr.vmem [resolvable:$true] %s1751
      %1754 = dma.vmem_to_hbm [thread:$0]  %s1752, 128, %s7, [#allocation4]
    $region37: #{tpu_custom_call.1} parent=1 // pred_fallthru
      _
    // Predicated region
    $region38: #{tpu_custom_call.1} parent=1 // pred_check
      _
    $region39: #{tpu_custom_call.1} parent=1 // pred_check_branch
      %1756 = sbr.rel (0) target = $region41
    $region40: #{tpu_custom_call.1} parent=1 // pred_region
      %s1758 = ssub.s32 128, 128
      %1759 = vsyncadd [#allocation7], %s1758
      %s1761 = sshll.u32 [#allocation6], 4
      %s1762 = int_to_ptr.vmem [resolvable:$true] %s1761
      %1764 = dma.vmem_to_hbm [thread:$0]  %s1762, 128, %s8, [#allocation7]
    $region41: #{tpu_custom_call.1} parent=1 // pred_fallthru
      _
    // Predicated region
    $region42: #{tpu_custom_call.1} parent=1 // pred_check
      _
    $region43: #{tpu_custom_call.1} parent=1 // pred_check_branch
      %1766 = sbr.rel (0) target = $region45
    $region44: #{tpu_custom_call.1} parent=1 // pred_region
      %1767 = dma.done [#allocation4], 128
    $region45: #{tpu_custom_call.1} parent=1 // pred_fallthru
      _
    // Predicated region
    $region46: #{tpu_custom_call.1} parent=1 // pred_check
      _
    $region47: #{tpu_custom_call.1} parent=1 // pred_check_branch
      %1769 = sbr.rel (0) target = $region49
    $region48: #{tpu_custom_call.1} parent=1 // pred_region
      %1770 = dma.done [#allocation7], 128
    $region49: #{tpu_custom_call.1} parent=1 // pred_fallthru
      _
    %1771 = vsyncpa [#allocation3], 1
    %1772 = vsyncpa [#allocation4], 1
    %1773 = vsyncpa [#allocation7], 1

</llo_original>
